<compile_context>
chip_gen: v6e
topology: v6e:2x2x1
jax: 0.10.0
libtpu: 0.0.40
codegen_flags: <defaults>
</compile_context>

<pallas_src>
import functools

import numpy as np
import jax
import jax.numpy as jnp
from jax.experimental import pallas as pl
from jax.experimental.pallas import tpu as pltpu

# ---------------- configuration matching ColorSH(__init__) ----------------
IN_CHANNELS = 3
SH_DEG = 3
NR_COEFFS = (SH_DEG + 1) ** 2               # 16
COLOR_CHANNELS = 3
OUT_CHANNELS = NR_COEFFS * COLOR_CHANNELS   # 48
MLP_LAYERS_DIMS = [32, 32]
NUM_FREQS = 6                               # multires=6 frequency encoder
POS_ENC_DIM = IN_CHANNELS + IN_CHANNELS * 2 * NUM_FREQS   # 39
BB_SIDES = 2.0                              # points scaled by 2/bb_sides

ENC_ROWS = 56                               # [sin(24) | cos(24) | p-block(8)]
MONO_ROWS = 24                              # 20 monomials (deg<=3) + padding

# standard real spherical-harmonic constants (degree <= 3)
C0 = 0.28209479177387814
C1 = 0.4886025119029199
C2 = (1.0925484305920792, -1.0925484305920792, 0.31539156525252005,
      -1.0925484305920792, 0.5462742152960396)
C3 = (-0.5900435899266435, 2.890611442640554, -0.4570457994644658,
      0.3731763325901154, -0.4570457994644658, 1.445305721320277,
      -0.5900435899266435)

# ------------------- trace-time constant matrices (numpy) -------------------
# monomial factor table; factor ids: 0=x, 1=y, 2=z, 3=constant one
_MONO_FACTORS = [
    (3, 3, 3),                                              # 1
    (0, 3, 3), (1, 3, 3), (2, 3, 3),                        # x, y, z
    (0, 0, 3), (1, 1, 3), (2, 2, 3),                        # xx, yy, zz
    (0, 1, 3), (0, 2, 3), (1, 2, 3),                        # xy, xz, yz
    (0, 0, 0), (1, 1, 1), (2, 2, 2),                        # xxx, yyy, zzz
    (0, 0, 1), (0, 0, 2), (0, 1, 1),                        # xxy, xxz, xyy
    (0, 1, 2), (0, 2, 2), (1, 1, 2), (1, 2, 2),             # xyz, xzz, yyz, yzz
    (3, 3, 3), (3, 3, 3), (3, 3, 3), (3, 3, 3),             # padding
]


def _midx(*axes):
    """Monomial row index for the given multiset of {x,y,z} factor ids."""
    key = tuple(sorted(axes))
    for i, f in enumerate(_MONO_FACTORS[:20]):
        if tuple(sorted(a for a in f if a != 3)) == key:
            return i
    raise KeyError(key)


def _build_constants():
    # frequency / phase column: fp[8j+i] = pa_tiled[8j+i] * freq[8j+i]
    # rows 8j+0..2 carry 2^(2j)*p, rows 8j+4..6 carry 2^(2j+1)*p, rows 3,7 junk
    freqs = np.zeros((MONO_ROWS, 1), np.float32)
    for j in range(3):
        freqs[8 * j + 0: 8 * j + 3, 0] = 2.0 ** (2 * j)
        freqs[8 * j + 4: 8 * j + 7, 0] = 2.0 ** (2 * j + 1)

    # selector matrices: mono = (SelU @ da) * (SelV @ da) * (SelW @ da)
    selu = np.zeros((MONO_ROWS, 8), np.float32)
    selv = np.zeros((MONO_ROWS, 8), np.float32)
    selw = np.zeros((MONO_ROWS, 8), np.float32)
    for r, (a, b, c) in enumerate(_MONO_FACTORS):
        selu[r, a] = 1.0
        selv[r, b] = 1.0
        selw[r, c] = 1.0

    # SH basis (degree 3) expressed over the monomial rows
    B = np.zeros((NR_COEFFS, MONO_ROWS), np.float32)
    B[0, _midx()] = C0
    B[1, _midx(1)] = -C1
    B[2, _midx(2)] = C1
    B[3, _midx(0)] = -C1
    B[4, _midx(0, 1)] = C2[0]
    B[5, _midx(1, 2)] = C2[1]
    B[6, _midx(2, 2)] = 2.0 * C2[2]
    B[6, _midx(0, 0)] = -C2[2]
    B[6, _midx(1, 1)] = -C2[2]
    B[7, _midx(0, 2)] = C2[3]
    B[8, _midx(0, 0)] = C2[4]
    B[8, _midx(1, 1)] = -C2[4]
    B[9, _midx(0, 0, 1)] = 3.0 * C3[0]
    B[9, _midx(1, 1, 1)] = -C3[0]
    B[10, _midx(0, 1, 2)] = C3[1]
    B[11, _midx(1, 2, 2)] = 4.0 * C3[2]
    B[11, _midx(0, 0, 1)] = -C3[2]
    B[11, _midx(1, 1, 1)] = -C3[2]
    B[12, _midx(2, 2, 2)] = 2.0 * C3[3]
    B[12, _midx(0, 0, 2)] = -3.0 * C3[3]
    B[12, _midx(1, 1, 2)] = -3.0 * C3[3]
    B[13, _midx(0, 2, 2)] = 4.0 * C3[4]
    B[13, _midx(0, 0, 0)] = -C3[4]
    B[13, _midx(0, 1, 1)] = -C3[4]
    B[14, _midx(0, 0, 2)] = C3[5]
    B[14, _midx(1, 1, 2)] = -C3[5]
    B[15, _midx(0, 0, 0)] = C3[6]
    B[15, _midx(0, 1, 1)] = -3.0 * C3[6]
    bmat3 = np.tile(B, (COLOR_CHANNELS, 1))                 # (48, 24)

    # per-channel coefficient reduction selector (rows 3..7 unused)
    sel3 = np.zeros((8, OUT_CHANNELS), np.float32)
    for ch in range(COLOR_CHANNELS):
        sel3[ch, ch * NR_COEFFS:(ch + 1) * NR_COEFFS] = 1.0

    return freqs, selu, selv, selw, bmat3, sel3


_FREQS, _SELU, _SELV, _SELW, _BMAT3, _SEL3 = _build_constants()


# --------------------------------- kernel ----------------------------------
def color_sh_kernel(points_ref, dirs_ref, freq_ref,
                    w1_ref, w2_ref, b2_ref, w3_ref, b3_ref,
                    selu_ref, selv_ref, selw_ref, bmat3_ref, sel3_ref,
                    out_ref):
    pa = points_ref[...]                 # (8, TM) f32: [x, y, z, 0, x, y, z, 1]
    da = dirs_ref[...]                   # (8, TM) f32: [x, y, z, 1, 0, 0, 0, 0]

    # ---- frequency positional encoding (exact f32 phases, aligned rows) ----
    fp = jnp.tile(pa, (3, 1)) * freq_ref[...]        # (24, TM)
    s = jnp.sin(fp)                                   # (24, TM) one EUP sweep
    c = jnp.cos(fp)                                   # (24, TM) one EUP sweep
    enc = jnp.concatenate([s, c, pa], axis=0).astype(jnp.bfloat16)   # (56, TM)

    # ---- MLP, layer-1 weights + bias fused into a single bf16 MXU dot ----
    h = jnp.dot(w1_ref[...], enc, preferred_element_type=jnp.float32)   # (32,TM)
    h = jnp.maximum(h, 0.0).astype(jnp.bfloat16)
    h = jnp.dot(w2_ref[...], h, preferred_element_type=jnp.float32) + b2_ref[...]
    h = jnp.maximum(h, 0.0).astype(jnp.bfloat16)                         # (32,TM)
    pred = (jnp.dot(w3_ref[...], h, preferred_element_type=jnp.float32)
            + b3_ref[...])                                               # (48,TM)

    # ---- SH basis via selector / constant matmuls on monomial blocks ----
    u = jnp.dot(selu_ref[...], da, preferred_element_type=jnp.float32)   # (24,TM)
    v = jnp.dot(selv_ref[...], da, preferred_element_type=jnp.float32)
    w = jnp.dot(selw_ref[...], da, preferred_element_type=jnp.float32)
    mono = (u * v * w).astype(jnp.bfloat16)                               # (24,TM)
    basis3 = jnp.dot(bmat3_ref[...], mono,
                     preferred_element_type=jnp.float32)                  # (48,TM)

    # ---- per-channel coefficient reduction on the MXU + sigmoid ----
    raw = jnp.dot(sel3_ref[...], pred * basis3,
                  preferred_element_type=jnp.float32)                     # (8, TM)
    out_ref[...] = jax.nn.sigmoid(raw[0:COLOR_CHANNELS, :])               # (3, TM)


# --------------------------------- wrapper ----------------------------------
@functools.partial(jax.jit, static_argnames=("tm",))
def color_sh_forward(points, samples_dirs, params, tm=4096):
    """points: (N, 3) f32, samples_dirs: (N, 3) unit f32 -> (N, 3) f32."""
    n = points.shape[0]
    w1, b1, w2, b2, w3, b3 = params
    hidden = w1.shape[1]

    # ---- fused layer-1 weight: columns follow the kernel's enc row layout ----
    zero_row = jnp.zeros((hidden,), w1.dtype)
    rows = []
    for j in range(3):                                   # sin block (24 rows)
        for k in (2 * j, 2 * j + 1):
            rows += [w1[3 + 6 * k + i] for i in range(3)]
            rows.append(zero_row)
    for j in range(3):                                   # cos block (24 rows)
        for k in (2 * j, 2 * j + 1):
            rows += [w1[6 + 6 * k + i] for i in range(3)]
            rows.append(zero_row)
    rows += [w1[i] for i in range(3)]                    # identity (p) part
    rows += [zero_row] * 4                               # unused p duplicates
    rows.append(b1[0])                                   # bias via ones row
    w1f = jnp.stack(rows, axis=0).T.astype(jnp.bfloat16)        # (32, 56)

    w2t = jnp.transpose(w2).astype(jnp.bfloat16)                # (32, 32)
    w3t = jnp.transpose(w3).astype(jnp.bfloat16)                # (48, 32)
    b2t = jnp.transpose(b2).astype(jnp.float32)                 # (32, 1)
    b3t = jnp.transpose(b3).astype(jnp.float32)                 # (48, 1)

    freqs = jnp.asarray(_FREQS)                                 # (24, 1) f32
    selu = jnp.asarray(_SELU)                                   # (24, 8) f32
    selv = jnp.asarray(_SELV)
    selw = jnp.asarray(_SELW)
    bmat3 = jnp.asarray(_BMAT3).astype(jnp.bfloat16)            # (48, 24)
    sel3 = jnp.asarray(_SEL3)                                   # (8, 48) f32

    # ---- feature-major inputs (features on sublanes, samples on lanes) ----
    pts = jnp.transpose(points).astype(jnp.float32) * (2.0 / BB_SIDES)   # (3, N)
    drs = jnp.transpose(samples_dirs).astype(jnp.float32)                # (3, N)
    ones1 = jnp.ones((1, n), jnp.float32)
    zeros1 = jnp.zeros((1, n), jnp.float32)
    pa = jnp.concatenate([pts, zeros1, pts, ones1], axis=0)     # (8, N)
    da = jnp.concatenate([drs, ones1, jnp.zeros((4, n), jnp.float32)], axis=0)

    # ---- tile selection: big lane-dense tiles; >= 2 grid steps when n > 128 ----
    tm = max(128, (int(tm) // 128) * 128)
    te = min(tm, max(128, 128 * pl.cdiv(pl.cdiv(n, 2), 128)))
    n_pad = te * pl.cdiv(n, te)
    if n_pad != n:
        pad = n_pad - n
        pa = jnp.pad(pa, ((0, 0), (0, pad)))
        da = jnp.pad(da, ((0, 0), (0, pad)))

    grid = (n_pad // te,)
    col_spec = lambda rows: pl.BlockSpec((rows, te), lambda i: (0, i))
    full_spec = lambda a: pl.BlockSpec(a.shape, lambda i: (0, 0))

    out_t = pl.pallas_call(
        color_sh_kernel,
        out_shape=jax.ShapeDtypeStruct((COLOR_CHANNELS, n_pad), jnp.float32),
        grid_spec=pltpu.PrefetchScalarGridSpec(
            num_scalar_prefetch=0,
            grid=grid,
            in_specs=[
                col_spec(8),                       # points block (8, N)
                col_spec(8),                       # dirs block   (8, N)
                full_spec(freqs),
                full_spec(w1f), full_spec(w2t), full_spec(b2t),
                full_spec(w3t), full_spec(b3t),
                full_spec(selu), full_spec(selv), full_spec(selw),
                full_spec(bmat3), full_spec(sel3),
            ],
            out_specs=col_spec(COLOR_CHANNELS),
        ),
        compiler_params=pltpu.CompilerParams(
            dimension_semantics=("parallel",),
            vmem_limit_bytes=48 * 1024 * 1024),
    )(pa, da, freqs, w1f, w2t, b2t, w3t, b3t, selu, selv, selw, bmat3, sel3)

    # TODO(synk): callers that can keep data feature-major end-to-end should
    # skip these wrapper transposes (extra ~72 B/sample of HBM traffic).
    return jnp.transpose(out_t[:, :n])             # (N, 3)


# --------------------------- reference & test data ---------------------------
def init_params(key):
    """Deterministic synthetic MLP parameters (39 -> 32 -> 32 -> 48)."""
    dims = [POS_ENC_DIM] + MLP_LAYERS_DIMS + [OUT_CHANNELS]
    params = []
    for din, dout in zip(dims[:-1], dims[1:]):
        key, kw, kb = jax.random.split(key, 3)
        scale = 1.0 / jnp.sqrt(jnp.float32(din))
        w = jax.random.uniform(kw, (din, dout), jnp.float32, -scale, scale)
        b = jax.random.uniform(kb, (1, dout), jnp.float32, -scale, scale)
        params += [w, b]
    return tuple(params)


def reference_forward(points, dirs, params):
    """Pure-JAX f32 reference matching ColorSH.forward (samples_dirs path)."""
    w1, b1, w2, b2, w3, b3 = params
    hi = jax.lax.Precision.HIGHEST
    p = points * (2.0 / BB_SIDES)
    feats = [p]
    for k in range(NUM_FREQS):
        f = float(2.0 ** k)
        feats += [jnp.sin(f * p), jnp.cos(f * p)]
    enc = jnp.concatenate(feats, axis=-1)                       # (N, 39)
    h = jnp.maximum(jnp.dot(enc, w1, precision=hi) + b1, 0.0)
    h = jnp.maximum(jnp.dot(h, w2, precision=hi) + b2, 0.0)
    pred = jnp.dot(h, w3, precision=hi) + b3                    # (N, 48)
    sh = pred.reshape(-1, COLOR_CHANNELS, NR_COEFFS)
    x, y, z = dirs[:, 0:1], dirs[:, 1:2], dirs[:, 2:3]
    xx, yy, zz = x * x, y * y, z * z
    xy, yz, xz = x * y, y * z, x * z
    basis = jnp.concatenate([
        jnp.full_like(x, C0),
        -C1 * y, C1 * z, -C1 * x,
        C2[0] * xy, C2[1] * yz, C2[2] * (2.0 * zz - xx - yy),
        C2[3] * xz, C2[4] * (xx - yy),
        C3[0] * y * (3.0 * xx - yy), C3[1] * xy * z,
        C3[2] * y * (4.0 * zz - xx - yy),
        C3[3] * z * (2.0 * zz - 3.0 * xx - 3.0 * yy),
        C3[4] * x * (4.0 * zz - xx - yy),
        C3[5] * z * (xx - yy), C3[6] * x * (xx - 3.0 * yy),
    ], axis=-1)                                                 # (N, 16)
    raw = jnp.sum(sh * basis[:, None, :], axis=-1)              # (N, 3)
    return jax.nn.sigmoid(raw)


if __name__ == "__main__":
    key = jax.random.PRNGKey(0)
    k_pts, k_dirs, k_par = jax.random.split(key, 3)

    N = 256
    points = jax.random.uniform(k_pts, (N, IN_CHANNELS), jnp.float32, -1.0, 1.0)
    dirs = jax.random.normal(k_dirs, (N, 3), jnp.float32)
    dirs = dirs / jnp.linalg.norm(dirs, axis=-1, keepdims=True)

    params = init_params(k_par)

    out = jax.block_until_ready(color_sh_forward(points, dirs, params))
    assert out.shape == (N, COLOR_CHANNELS)
    assert bool(jnp.all(jnp.isfinite(out)))

    ref = reference_forward(points, dirs, params)
    max_err = float(jnp.max(jnp.abs(out - ref)))
    # bf16 MXU operands (per perf review) vs. f32-HIGHEST reference; sigmoid
    # compresses the error, genuine bugs would be orders of magnitude larger.
    assert max_err < 1e-2, f"max abs error vs reference: {max_err}"

    print("KERNEL_OK")
</pallas_src>

<mosaic_0001>
module attributes {stable_mosaic.version = 11 : i64} {
  func.func @color_sh_kernel(%arg0: i32, %arg1: memref<8x128xf32, #tpu.memory_space<vmem>>, %arg2: memref<8x128xf32, #tpu.memory_space<vmem>>, %arg3: memref<24x1xf32, #tpu.memory_space<vmem>>, %arg4: memref<32x56xbf16, #tpu.memory_space<vmem>>, %arg5: memref<32x32xbf16, #tpu.memory_space<vmem>>, %arg6: memref<32x1xf32, #tpu.memory_space<vmem>>, %arg7: memref<48x32xbf16, #tpu.memory_space<vmem>>, %arg8: memref<48x1xf32, #tpu.memory_space<vmem>>, %arg9: memref<24x8xf32, #tpu.memory_space<vmem>>, %arg10: memref<24x8xf32, #tpu.memory_space<vmem>>, %arg11: memref<24x8xf32, #tpu.memory_space<vmem>>, %arg12: memref<48x24xbf16, #tpu.memory_space<vmem>>, %arg13: memref<8x48xf32, #tpu.memory_space<vmem>>, %arg14: memref<3x128xf32, #tpu.memory_space<vmem>>) attributes {dimension_semantics = [#tpu.dimension_semantics<parallel>], iteration_bounds = array<i64: 2>, scalar_prefetch = 0 : i64, scratch_operands = 0 : i64, tpu.core_type = #tpu.core_type<tc>, window_params = [{transform_indices = @transform_0, window_bounds = array<i64: 8, 128>}, {transform_indices = @transform_1, window_bounds = array<i64: 8, 128>}, {pipeline_mode = #tpu.pipeline_mode<synchronous>, transform_indices = @transform_2, window_bounds = array<i64: 24, 1>}, {pipeline_mode = #tpu.pipeline_mode<synchronous>, transform_indices = @transform_3, window_bounds = array<i64: 32, 56>}, {pipeline_mode = #tpu.pipeline_mode<synchronous>, transform_indices = @transform_4, window_bounds = array<i64: 32, 32>}, {pipeline_mode = #tpu.pipeline_mode<synchronous>, transform_indices = @transform_5, window_bounds = array<i64: 32, 1>}, {pipeline_mode = #tpu.pipeline_mode<synchronous>, transform_indices = @transform_6, window_bounds = array<i64: 48, 32>}, {pipeline_mode = #tpu.pipeline_mode<synchronous>, transform_indices = @transform_7, window_bounds = array<i64: 48, 1>}, {pipeline_mode = #tpu.pipeline_mode<synchronous>, transform_indices = @transform_8, window_bounds = array<i64: 24, 8>}, {pipeline_mode = #tpu.pipeline_mode<synchronous>, transform_indices = @transform_9, window_bounds = array<i64: 24, 8>}, {pipeline_mode = #tpu.pipeline_mode<synchronous>, transform_indices = @transform_10, window_bounds = array<i64: 24, 8>}, {pipeline_mode = #tpu.pipeline_mode<synchronous>, transform_indices = @transform_11, window_bounds = array<i64: 48, 24>}, {pipeline_mode = #tpu.pipeline_mode<synchronous>, transform_indices = @transform_12, window_bounds = array<i64: 8, 48>}, {transform_indices = @transform_13, window_bounds = array<i64: 3, 128>}]} {
    %c0 = arith.constant 0 : index
    %c0_0 = arith.constant 0 : index
    %0 = vector.load %arg1[%c0, %c0_0] : memref<8x128xf32, #tpu.memory_space<vmem>>, vector<8x128xf32>
    %c0_1 = arith.constant 0 : index
    %c0_2 = arith.constant 0 : index
    %1 = vector.load %arg2[%c0_1, %c0_2] : memref<8x128xf32, #tpu.memory_space<vmem>>, vector<8x128xf32>
    %2 = tpu.concatenate %0, %0, %0 in 0 : vector<8x128xf32>, vector<8x128xf32>, vector<8x128xf32> -> vector<24x128xf32>
    %c0_3 = arith.constant 0 : index
    %c0_4 = arith.constant 0 : index
    %3 = vector.load %arg3[%c0_3, %c0_4] : memref<24x1xf32, #tpu.memory_space<vmem>>, vector<24x1xf32>
    %4 = vector.broadcast %3 : vector<24x1xf32> to vector<24x128xf32>
    %5 = arith.mulf %2, %4 : vector<24x128xf32>
    %6 = math.sin %5 : vector<24x128xf32>
    %7 = math.cos %5 : vector<24x128xf32>
    %8 = tpu.concatenate %6, %7, %0 in 0 : vector<24x128xf32>, vector<24x128xf32>, vector<8x128xf32> -> vector<56x128xf32>
    %9 = arith.truncf %8 : vector<56x128xf32> to vector<56x128xbf16>
    %c0_5 = arith.constant 0 : index
    %c0_6 = arith.constant 0 : index
    %10 = vector.load %arg4[%c0_5, %c0_6] : memref<32x56xbf16, #tpu.memory_space<vmem>>, vector<32x56xbf16>
    %cst = arith.constant dense<0.000000e+00> : vector<32x128xf32>
    %11 = tpu.matmul %10, %9, %cst {dimension_numbers = #tpu.dot_dimension_numbers<[1], [0], [0], [1], [0, 0, 1, 1], [], []>} : vector<32x56xbf16>, vector<56x128xbf16>, vector<32x128xf32> -> vector<32x128xf32>
    %cst_7 = arith.constant 0.000000e+00 : f32
    %12 = vector.broadcast %cst_7 : f32 to vector<32x128xf32>
    %13 = arith.maximumf %11, %12 : vector<32x128xf32>
    %14 = arith.truncf %13 : vector<32x128xf32> to vector<32x128xbf16>
    %c0_8 = arith.constant 0 : index
    %c0_9 = arith.constant 0 : index
    %15 = vector.load %arg5[%c0_8, %c0_9] : memref<32x32xbf16, #tpu.memory_space<vmem>>, vector<32x32xbf16>
    %cst_10 = arith.constant dense<0.000000e+00> : vector<32x128xf32>
    %16 = tpu.matmul %15, %14, %cst_10 {dimension_numbers = #tpu.dot_dimension_numbers<[1], [0], [0], [1], [0, 0, 1, 1], [], []>} : vector<32x32xbf16>, vector<32x128xbf16>, vector<32x128xf32> -> vector<32x128xf32>
    %c0_11 = arith.constant 0 : index
    %c0_12 = arith.constant 0 : index
    %17 = vector.load %arg6[%c0_11, %c0_12] : memref<32x1xf32, #tpu.memory_space<vmem>>, vector<32x1xf32>
    %18 = vector.broadcast %17 : vector<32x1xf32> to vector<32x128xf32>
    %19 = arith.addf %16, %18 : vector<32x128xf32>
    %cst_13 = arith.constant 0.000000e+00 : f32
    %20 = vector.broadcast %cst_13 : f32 to vector<32x128xf32>
    %21 = arith.maximumf %19, %20 : vector<32x128xf32>
    %22 = arith.truncf %21 : vector<32x128xf32> to vector<32x128xbf16>
    %c0_14 = arith.constant 0 : index
    %c0_15 = arith.constant 0 : index
    %23 = vector.load %arg7[%c0_14, %c0_15] : memref<48x32xbf16, #tpu.memory_space<vmem>>, vector<48x32xbf16>
    %cst_16 = arith.constant dense<0.000000e+00> : vector<48x128xf32>
    %24 = tpu.matmul %23, %22, %cst_16 {dimension_numbers = #tpu.dot_dimension_numbers<[1], [0], [0], [1], [0, 0, 1, 1], [], []>} : vector<48x32xbf16>, vector<32x128xbf16>, vector<48x128xf32> -> vector<48x128xf32>
    %c0_17 = arith.constant 0 : index
    %c0_18 = arith.constant 0 : index
    %25 = vector.load %arg8[%c0_17, %c0_18] : memref<48x1xf32, #tpu.memory_space<vmem>>, vector<48x1xf32>
    %26 = vector.broadcast %25 : vector<48x1xf32> to vector<48x128xf32>
    %27 = arith.addf %24, %26 : vector<48x128xf32>
    %c0_19 = arith.constant 0 : index
    %c0_20 = arith.constant 0 : index
    %28 = vector.load %arg9[%c0_19, %c0_20] : memref<24x8xf32, #tpu.memory_space<vmem>>, vector<24x8xf32>
    %cst_21 = arith.constant dense<0.000000e+00> : vector<24x128xf32>
    %29 = tpu.matmul %28, %1, %cst_21 {dimension_numbers = #tpu.dot_dimension_numbers<[1], [0], [0], [1], [0, 0, 1, 1], [], []>} : vector<24x8xf32>, vector<8x128xf32>, vector<24x128xf32> -> vector<24x128xf32>
    %c0_22 = arith.constant 0 : index
    %c0_23 = arith.constant 0 : index
    %30 = vector.load %arg10[%c0_22, %c0_23] : memref<24x8xf32, #tpu.memory_space<vmem>>, vector<24x8xf32>
    %cst_24 = arith.constant dense<0.000000e+00> : vector<24x128xf32>
    %31 = tpu.matmul %30, %1, %cst_24 {dimension_numbers = #tpu.dot_dimension_numbers<[1], [0], [0], [1], [0, 0, 1, 1], [], []>} : vector<24x8xf32>, vector<8x128xf32>, vector<24x128xf32> -> vector<24x128xf32>
    %c0_25 = arith.constant 0 : index
    %c0_26 = arith.constant 0 : index
    %32 = vector.load %arg11[%c0_25, %c0_26] : memref<24x8xf32, #tpu.memory_space<vmem>>, vector<24x8xf32>
    %cst_27 = arith.constant dense<0.000000e+00> : vector<24x128xf32>
    %33 = tpu.matmul %32, %1, %cst_27 {dimension_numbers = #tpu.dot_dimension_numbers<[1], [0], [0], [1], [0, 0, 1, 1], [], []>} : vector<24x8xf32>, vector<8x128xf32>, vector<24x128xf32> -> vector<24x128xf32>
    %34 = arith.mulf %29, %31 : vector<24x128xf32>
    %35 = arith.mulf %34, %33 : vector<24x128xf32>
    %36 = arith.truncf %35 : vector<24x128xf32> to vector<24x128xbf16>
    %c0_28 = arith.constant 0 : index
    %c0_29 = arith.constant 0 : index
    %37 = vector.load %arg12[%c0_28, %c0_29] : memref<48x24xbf16, #tpu.memory_space<vmem>>, vector<48x24xbf16>
    %cst_30 = arith.constant dense<0.000000e+00> : vector<48x128xf32>
    %38 = tpu.matmul %37, %36, %cst_30 {dimension_numbers = #tpu.dot_dimension_numbers<[1], [0], [0], [1], [0, 0, 1, 1], [], []>} : vector<48x24xbf16>, vector<24x128xbf16>, vector<48x128xf32> -> vector<48x128xf32>
    %c0_31 = arith.constant 0 : index
    %c0_32 = arith.constant 0 : index
    %39 = vector.load %arg13[%c0_31, %c0_32] : memref<8x48xf32, #tpu.memory_space<vmem>>, vector<8x48xf32>
    %40 = arith.mulf %27, %38 : vector<48x128xf32>
    %cst_33 = arith.constant dense<0.000000e+00> : vector<8x128xf32>
    %41 = tpu.matmul %39, %40, %cst_33 {dimension_numbers = #tpu.dot_dimension_numbers<[1], [0], [0], [1], [0, 0, 1, 1], [], []>} : vector<8x48xf32>, vector<48x128xf32>, vector<8x128xf32> -> vector<8x128xf32>
    %42 = vector.extract_strided_slice %41 {offsets = [0, 0], sizes = [3, 128], strides = [1, 1]} : vector<8x128xf32> to vector<3x128xf32>
    %43 = arith.negf %42 : vector<3x128xf32>
    %44 = math.exp %43 : vector<3x128xf32>
    %cst_34 = arith.constant 1.000000e+00 : f32
    %45 = vector.broadcast %cst_34 : f32 to vector<3x128xf32>
    %46 = arith.addf %45, %44 : vector<3x128xf32>
    %47 = arith.divf %45, %46 : vector<3x128xf32>
    %c0_35 = arith.constant 0 : index
    %c0_36 = arith.constant 0 : index
    %48 = vector.load %arg14[%c0_35, %c0_36] : memref<3x128xf32, #tpu.memory_space<vmem>>, vector<3x128xf32>
    tpu.vector_store %arg14[%c0_35, %c0_36], %47 {strides = array<i32>} : memref<3x128xf32, #tpu.memory_space<vmem>>, vector<3x128xf32>,
    return
  }
  func.func @transform_0(%arg0: i32) -> (i32, i32) {
    %c0_i32 = arith.constant 0 : i32
    %c0_i32_0 = arith.constant 0 : i32
    return %c0_i32, %arg0 : i32, i32
  }
  func.func @transform_1(%arg0: i32) -> (i32, i32) {
    %c0_i32 = arith.constant 0 : i32
    %c0_i32_0 = arith.constant 0 : i32
    return %c0_i32, %arg0 : i32, i32
  }
  func.func @transform_2(%arg0: i32) -> (i32, i32) {
    %c0_i32 = arith.constant 0 : i32
    %c0_i32_0 = arith.constant 0 : i32
    %c0_i32_1 = arith.constant 0 : i32
    return %c0_i32, %c0_i32_0 : i32, i32
  }
  func.func @transform_3(%arg0: i32) -> (i32, i32) {
    %c0_i32 = arith.constant 0 : i32
    %c0_i32_0 = arith.constant 0 : i32
    %c0_i32_1 = arith.constant 0 : i32
    return %c0_i32, %c0_i32_0 : i32, i32
  }
  func.func @transform_4(%arg0: i32) -> (i32, i32) {
    %c0_i32 = arith.constant 0 : i32
    %c0_i32_0 = arith.constant 0 : i32
    %c0_i32_1 = arith.constant 0 : i32
    return %c0_i32, %c0_i32_0 : i32, i32
  }
  func.func @transform_5(%arg0: i32) -> (i32, i32) {
    %c0_i32 = arith.constant 0 : i32
    %c0_i32_0 = arith.constant 0 : i32
    %c0_i32_1 = arith.constant 0 : i32
    return %c0_i32, %c0_i32_0 : i32, i32
  }
  func.func @transform_6(%arg0: i32) -> (i32, i32) {
    %c0_i32 = arith.constant 0 : i32
    %c0_i32_0 = arith.constant 0 : i32
    %c0_i32_1 = arith.constant 0 : i32
    return %c0_i32, %c0_i32_0 : i32, i32
  }
  func.func @transform_7(%arg0: i32) -> (i32, i32) {
    %c0_i32 = arith.constant 0 : i32
    %c0_i32_0 = arith.constant 0 : i32
    %c0_i32_1 = arith.constant 0 : i32
    return %c0_i32, %c0_i32_0 : i32, i32
  }
  func.func @transform_8(%arg0: i32) -> (i32, i32) {
    %c0_i32 = arith.constant 0 : i32
    %c0_i32_0 = arith.constant 0 : i32
    %c0_i32_1 = arith.constant 0 : i32
    return %c0_i32, %c0_i32_0 : i32, i32
  }
  func.func @transform_9(%arg0: i32) -> (i32, i32) {
    %c0_i32 = arith.constant 0 : i32
    %c0_i32_0 = arith.constant 0 : i32
    %c0_i32_1 = arith.constant 0 : i32
    return %c0_i32, %c0_i32_0 : i32, i32
  }
  func.func @transform_10(%arg0: i32) -> (i32, i32) {
    %c0_i32 = arith.constant 0 : i32
    %c0_i32_0 = arith.constant 0 : i32
    %c0_i32_1 = arith.constant 0 : i32
    return %c0_i32, %c0_i32_0 : i32, i32
  }
  func.func @transform_11(%arg0: i32) -> (i32, i32) {
    %c0_i32 = arith.constant 0 : i32
    %c0_i32_0 = arith.constant 0 : i32
    %c0_i32_1 = arith.constant 0 : i32
    return %c0_i32, %c0_i32_0 : i32, i32
  }
  func.func @transform_12(%arg0: i32) -> (i32, i32) {
    %c0_i32 = arith.constant 0 : i32
    %c0_i32_0 = arith.constant 0 : i32
    %c0_i32_1 = arith.constant 0 : i32
    return %c0_i32, %c0_i32_0 : i32, i32
  }
  func.func @transform_13(%arg0: i32) -> (i32, i32) {
    %c0_i32 = arith.constant 0 : i32
    %c0_i32_0 = arith.constant 0 : i32
    return %c0_i32, %arg0 : i32, i32
  }
}

</mosaic_0001>

<llo_original>
// kernel: color_sh_forward.1
$region0: #{color_sh_forward.1}
  #allocation0 [shape = 'u32[]', space=smem, size = 0x4, offset = 0x4, fixed_abs, tag = 'smem constant byte address 0x4 - core index']
  #allocation1 [shape = 'u32[144,128]{1,0:T(1,128)}', space=vmem, size = 0x12000, scoped, tag = 'internal scratch']
  %s0 = inlined_call_operand.vmem [shape: f32[8,256], index: 0, kind: input, shape index: {}]
  %s1 = inlined_call_operand.vmem [shape: f32[8,256], index: 1, kind: input, shape index: {}]
  %s2 = inlined_call_operand.vmem [shape: f32[24,1], index: 2, kind: input, shape index: {}]
  %s3 = inlined_call_operand.vmem [shape: bf16[32,56], index: 3, kind: input, shape index: {}]
  %s4 = inlined_call_operand.vmem [shape: bf16[32,32], index: 4, kind: input, shape index: {}]
  %s5 = inlined_call_operand.vmem [shape: f32[32,1], index: 5, kind: input, shape index: {}]
  %s6 = inlined_call_operand.vmem [shape: bf16[48,32], index: 6, kind: input, shape index: {}]
  %s7 = inlined_call_operand.vmem [shape: f32[48,1], index: 7, kind: input, shape index: {}]
  %s8 = inlined_call_operand.vmem [shape: f32[24,8], index: 8, kind: input, shape index: {}]
  %s9 = inlined_call_operand.vmem [shape: f32[24,8], index: 9, kind: input, shape index: {}]
  %s10 = inlined_call_operand.vmem [shape: f32[24,8], index: 10, kind: input, shape index: {}]
  %s11 = inlined_call_operand.vmem [shape: bf16[48,24], index: 11, kind: input, shape index: {}]
  %s12 = inlined_call_operand.vmem [shape: f32[8,48], index: 12, kind: input, shape index: {}]
  %s13 = inlined_call_operand.hbm [shape: f32[3,256], index: 13, kind: output, shape index: {}]
  %s14 = sld [smem:[#allocation0]]
  $region85: #{color_sh_forward.1} parent=0
    _
  %s16 = ssub.s32 1, %s14
  %s17 = scalar_select 0, %s16, %s14
  $region1: #{color_sh_forward.1} parent=0
    #allocation2 [shape = 'u8[4096]{0}', space=vmem, size = 0x1000, scoped, tag = 'output window, operand 0']
    #allocation3 [shape = 's32[2]{0}', space=sflag, size = 0x8, scoped, tag = 'scoped memory for color_sh_forward.1']
    %18 = vsyncpa [#allocation3], 0
    %s19 = scalar_lea.sflag [#allocation3], 1
    %20 = vsyncpa %s19, 0
    loop: start=0, step=1, limit=4
    $region2: #{color_sh_forward.1} parent=1 // loop_pre_header
      _
    $region3: #{color_sh_forward.1} parent=1 // loop_header
      %s22 = sphi 0, %s26
      %p23 = scmp.ge.s32.totalorder %s22, 4
      %s32 = sphi 0, %s34
      %s35 = sphi 0, %s32
      %s36 = sphi 0, %s35
      %s52 = sphi 0, %s36
      %s58 = sphi 0, %s60
      %s61 = sphi 0, %s58
      %s62 = sphi 0, %s61
      %s78 = sphi 0, %s62
      %s82 = sphi 0, %s82
      %s84 = sphi 0, %s82
      %s85 = sphi 0, %s84
      %s99 = sphi 0, %s85
      %s103 = sphi 0, %s103
      %s105 = sphi 0, %s103
      %s106 = sphi 0, %s105
      %s120 = sphi 0, %s106
      %s124 = sphi 0, %s124
      %s126 = sphi 0, %s124
      %s127 = sphi 0, %s126
      %s141 = sphi 0, %s127
      %s145 = sphi 0, %s145
      %s147 = sphi 0, %s145
      %s148 = sphi 0, %s147
      %s162 = sphi 0, %s148
      %s166 = sphi 0, %s166
      %s168 = sphi 0, %s166
      %s169 = sphi 0, %s168
      %s183 = sphi 0, %s169
      %s187 = sphi 0, %s187
      %s189 = sphi 0, %s187
      %s190 = sphi 0, %s189
      %s204 = sphi 0, %s190
      %s208 = sphi 0, %s208
      %s210 = sphi 0, %s208
      %s211 = sphi 0, %s210
      %s225 = sphi 0, %s211
      %s229 = sphi 0, %s229
      %s231 = sphi 0, %s229
      %s232 = sphi 0, %s231
      %s246 = sphi 0, %s232
      %s250 = sphi 0, %s250
      %s252 = sphi 0, %s250
      %s253 = sphi 0, %s252
      %s267 = sphi 0, %s253
      %s271 = sphi 0, %s271
      %s273 = sphi 0, %s271
      %s274 = sphi 0, %s273
      %s288 = sphi 0, %s274
      %s292 = sphi 0, %s292
      %s294 = sphi 0, %s292
      %s295 = sphi 0, %s294
      %s309 = sphi 0, %s295
      %s315 = sphi 0, %s317
      %s318 = sphi 0, %s315
      %s319 = sphi 0, %s318
      %s335 = sphi 0, %s319
    $region4: #{color_sh_forward.1} parent=1 // loop_header_branch
      %25 = sbr.rel (%p23) target = $region8
    $region5: #{color_sh_forward.1} parent=1 // loop_body
      %s27 = ssub.s32 %s22, 1
      %s28 = ssub.s32 %s22, 2
      %s29 = sadd.s32 %s22, 1
      %s30 = ssub.s32 %s22, %s29
      %p31 = scmp.eq.s32.totalorder %s30, 0
      %s33 = sadd.s32 %s32, 1
      %s34 = scalar_select %p31, %s32, %s33
      %p37 = pneg %p31
      %p38 = scmp.eq.s32.totalorder %s22, 1
      %p39 = por %p37, %p38
      %p40 = scmp.ne.s32.totalorder %s32, %s35
      %p41 = scmp.eq.s32.totalorder %s22, 0
      %p42 = por %p40, %p41
      %p43 = scmp.ne.s32.totalorder %s32, %s35
      %p44 = scmp.eq.s32.totalorder %s27, 1
      %p45 = por %p43, %p44
      %p46 = scmp.ne.s32.totalorder %s35, %s36
      %p47 = scmp.eq.s32.totalorder %s27, 0
      %p48 = por %p46, %p47
      %p49 = scmp.ne.s32.totalorder %s35, %s36
      %p50 = scmp.eq.s32.totalorder %s28, 1
      %p51 = por %p49, %p50
      %p53 = scmp.ne.s32.totalorder %s36, %s52
      %p54 = scmp.eq.s32.totalorder %s28, 0
      %p55 = por %p53, %p54
      %s56 = ssub.s32 %s22, %s29
      %p57 = scmp.eq.s32.totalorder %s56, 0
      %s59 = sadd.s32 %s58, 1
      %s60 = scalar_select %p57, %s58, %s59
      %p63 = pneg %p57
      %p64 = scmp.eq.s32.totalorder %s22, 1
      %p65 = por %p63, %p64
      %p66 = scmp.ne.s32.totalorder %s58, %s61
      %p67 = scmp.eq.s32.totalorder %s22, 0
      %p68 = por %p66, %p67
      %p69 = scmp.ne.s32.totalorder %s58, %s61
      %p70 = scmp.eq.s32.totalorder %s27, 1
      %p71 = por %p69, %p70
      %p72 = scmp.ne.s32.totalorder %s61, %s62
      %p73 = scmp.eq.s32.totalorder %s27, 0
      %p74 = por %p72, %p73
      %p75 = scmp.ne.s32.totalorder %s61, %s62
      %p76 = scmp.eq.s32.totalorder %s28, 1
      %p77 = por %p75, %p76
      %p79 = scmp.ne.s32.totalorder %s62, %s78
      %p80 = scmp.eq.s32.totalorder %s28, 0
      %p81 = por %p79, %p80
      %s83 = sadd.s32 %s82, 1
      %p86 = scmp.eq.s32.totalorder %s22, 1
      %p87 = scmp.ne.s32.totalorder %s82, %s84
      %p88 = scmp.eq.s32.totalorder %s22, 0
      %p89 = por %p87, %p88
      %p90 = scmp.ne.s32.totalorder %s82, %s84
      %p91 = scmp.eq.s32.totalorder %s27, 1
      %p92 = por %p90, %p91
      %p93 = scmp.ne.s32.totalorder %s84, %s85
      %p94 = scmp.eq.s32.totalorder %s27, 0
      %p95 = por %p93, %p94
      %p96 = scmp.ne.s32.totalorder %s84, %s85
      %p97 = scmp.eq.s32.totalorder %s28, 1
      %p98 = por %p96, %p97
      %p100 = scmp.ne.s32.totalorder %s85, %s99
      %p101 = scmp.eq.s32.totalorder %s28, 0
      %p102 = por %p100, %p101
      %s104 = sadd.s32 %s103, 1
      %p107 = scmp.eq.s32.totalorder %s22, 1
      %p108 = scmp.ne.s32.totalorder %s103, %s105
      %p109 = scmp.eq.s32.totalorder %s22, 0
      %p110 = por %p108, %p109
      %p111 = scmp.ne.s32.totalorder %s103, %s105
      %p112 = scmp.eq.s32.totalorder %s27, 1
      %p113 = por %p111, %p112
      %p114 = scmp.ne.s32.totalorder %s105, %s106
      %p115 = scmp.eq.s32.totalorder %s27, 0
      %p116 = por %p114, %p115
      %p117 = scmp.ne.s32.totalorder %s105, %s106
      %p118 = scmp.eq.s32.totalorder %s28, 1
      %p119 = por %p117, %p118
      %p121 = scmp.ne.s32.totalorder %s106, %s120
      %p122 = scmp.eq.s32.totalorder %s28, 0
      %p123 = por %p121, %p122
      %s125 = sadd.s32 %s124, 1
      %p128 = scmp.eq.s32.totalorder %s22, 1
      %p129 = scmp.ne.s32.totalorder %s124, %s126
      %p130 = scmp.eq.s32.totalorder %s22, 0
      %p131 = por %p129, %p130
      %p132 = scmp.ne.s32.totalorder %s124, %s126
      %p133 = scmp.eq.s32.totalorder %s27, 1
      %p134 = por %p132, %p133
      %p135 = scmp.ne.s32.totalorder %s126, %s127
      %p136 = scmp.eq.s32.totalorder %s27, 0
      %p137 = por %p135, %p136
      %p138 = scmp.ne.s32.totalorder %s126, %s127
      %p139 = scmp.eq.s32.totalorder %s28, 1
      %p140 = por %p138, %p139
      %p142 = scmp.ne.s32.totalorder %s127, %s141
      %p143 = scmp.eq.s32.totalorder %s28, 0
      %p144 = por %p142, %p143
      %s146 = sadd.s32 %s145, 1
      %p149 = scmp.eq.s32.totalorder %s22, 1
      %p150 = scmp.ne.s32.totalorder %s145, %s147
      %p151 = scmp.eq.s32.totalorder %s22, 0
      %p152 = por %p150, %p151
      %p153 = scmp.ne.s32.totalorder %s145, %s147
      %p154 = scmp.eq.s32.totalorder %s27, 1
      %p155 = por %p153, %p154
      %p156 = scmp.ne.s32.totalorder %s147, %s148
      %p157 = scmp.eq.s32.totalorder %s27, 0
      %p158 = por %p156, %p157
      %p159 = scmp.ne.s32.totalorder %s147, %s148
      %p160 = scmp.eq.s32.totalorder %s28, 1
      %p161 = por %p159, %p160
      %p163 = scmp.ne.s32.totalorder %s148, %s162
      %p164 = scmp.eq.s32.totalorder %s28, 0
      %p165 = por %p163, %p164
      %s167 = sadd.s32 %s166, 1
      %p170 = scmp.eq.s32.totalorder %s22, 1
      %p171 = scmp.ne.s32.totalorder %s166, %s168
      %p172 = scmp.eq.s32.totalorder %s22, 0
      %p173 = por %p171, %p172
      %p174 = scmp.ne.s32.totalorder %s166, %s168
      %p175 = scmp.eq.s32.totalorder %s27, 1
      %p176 = por %p174, %p175
      %p177 = scmp.ne.s32.totalorder %s168, %s169
      %p178 = scmp.eq.s32.totalorder %s27, 0
      %p179 = por %p177, %p178
      %p180 = scmp.ne.s32.totalorder %s168, %s169
      %p181 = scmp.eq.s32.totalorder %s28, 1
      %p182 = por %p180, %p181
      %p184 = scmp.ne.s32.totalorder %s169, %s183
      %p185 = scmp.eq.s32.totalorder %s28, 0
      %p186 = por %p184, %p185
      %s188 = sadd.s32 %s187, 1
      %p191 = scmp.eq.s32.totalorder %s22, 1
      %p192 = scmp.ne.s32.totalorder %s187, %s189
      %p193 = scmp.eq.s32.totalorder %s22, 0
      %p194 = por %p192, %p193
      %p195 = scmp.ne.s32.totalorder %s187, %s189
      %p196 = scmp.eq.s32.totalorder %s27, 1
      %p197 = por %p195, %p196
      %p198 = scmp.ne.s32.totalorder %s189, %s190
      %p199 = scmp.eq.s32.totalorder %s27, 0
      %p200 = por %p198, %p199
      %p201 = scmp.ne.s32.totalorder %s189, %s190
      %p202 = scmp.eq.s32.totalorder %s28, 1
      %p203 = por %p201, %p202
      %p205 = scmp.ne.s32.totalorder %s190, %s204
      %p206 = scmp.eq.s32.totalorder %s28, 0
      %p207 = por %p205, %p206
      %s209 = sadd.s32 %s208, 1
      %p212 = scmp.eq.s32.totalorder %s22, 1
      %p213 = scmp.ne.s32.totalorder %s208, %s210
      %p214 = scmp.eq.s32.totalorder %s22, 0
      %p215 = por %p213, %p214
      %p216 = scmp.ne.s32.totalorder %s208, %s210
      %p217 = scmp.eq.s32.totalorder %s27, 1
      %p218 = por %p216, %p217
      %p219 = scmp.ne.s32.totalorder %s210, %s211
      %p220 = scmp.eq.s32.totalorder %s27, 0
      %p221 = por %p219, %p220
      %p222 = scmp.ne.s32.totalorder %s210, %s211
      %p223 = scmp.eq.s32.totalorder %s28, 1
      %p224 = por %p222, %p223
      %p226 = scmp.ne.s32.totalorder %s211, %s225
      %p227 = scmp.eq.s32.totalorder %s28, 0
      %p228 = por %p226, %p227
      %s230 = sadd.s32 %s229, 1
      %p233 = scmp.eq.s32.totalorder %s22, 1
      %p234 = scmp.ne.s32.totalorder %s229, %s231
      %p235 = scmp.eq.s32.totalorder %s22, 0
      %p236 = por %p234, %p235
      %p237 = scmp.ne.s32.totalorder %s229, %s231
      %p238 = scmp.eq.s32.totalorder %s27, 1
      %p239 = por %p237, %p238
      %p240 = scmp.ne.s32.totalorder %s231, %s232
      %p241 = scmp.eq.s32.totalorder %s27, 0
      %p242 = por %p240, %p241
      %p243 = scmp.ne.s32.totalorder %s231, %s232
      %p244 = scmp.eq.s32.totalorder %s28, 1
      %p245 = por %p243, %p244
      %p247 = scmp.ne.s32.totalorder %s232, %s246
      %p248 = scmp.eq.s32.totalorder %s28, 0
      %p249 = por %p247, %p248
      %s251 = sadd.s32 %s250, 1
      %p254 = scmp.eq.s32.totalorder %s22, 1
      %p255 = scmp.ne.s32.totalorder %s250, %s252
      %p256 = scmp.eq.s32.totalorder %s22, 0
      %p257 = por %p255, %p256
      %p258 = scmp.ne.s32.totalorder %s250, %s252
      %p259 = scmp.eq.s32.totalorder %s27, 1
      %p260 = por %p258, %p259
      %p261 = scmp.ne.s32.totalorder %s252, %s253
      %p262 = scmp.eq.s32.totalorder %s27, 0
      %p263 = por %p261, %p262
      %p264 = scmp.ne.s32.totalorder %s252, %s253
      %p265 = scmp.eq.s32.totalorder %s28, 1
      %p266 = por %p264, %p265
      %p268 = scmp.ne.s32.totalorder %s253, %s267
      %p269 = scmp.eq.s32.totalorder %s28, 0
      %p270 = por %p268, %p269
      %s272 = sadd.s32 %s271, 1
      %p275 = scmp.eq.s32.totalorder %s22, 1
      %p276 = scmp.ne.s32.totalorder %s271, %s273
      %p277 = scmp.eq.s32.totalorder %s22, 0
      %p278 = por %p276, %p277
      %p279 = scmp.ne.s32.totalorder %s271, %s273
      %p280 = scmp.eq.s32.totalorder %s27, 1
      %p281 = por %p279, %p280
      %p282 = scmp.ne.s32.totalorder %s273, %s274
      %p283 = scmp.eq.s32.totalorder %s27, 0
      %p284 = por %p282, %p283
      %p285 = scmp.ne.s32.totalorder %s273, %s274
      %p286 = scmp.eq.s32.totalorder %s28, 1
      %p287 = por %p285, %p286
      %p289 = scmp.ne.s32.totalorder %s274, %s288
      %p290 = scmp.eq.s32.totalorder %s28, 0
      %p291 = por %p289, %p290
      %s293 = sadd.s32 %s292, 1
      %p296 = scmp.eq.s32.totalorder %s22, 1
      %p297 = scmp.ne.s32.totalorder %s292, %s294
      %p298 = scmp.eq.s32.totalorder %s22, 0
      %p299 = por %p297, %p298
      %p300 = scmp.ne.s32.totalorder %s292, %s294
      %p301 = scmp.eq.s32.totalorder %s27, 1
      %p302 = por %p300, %p301
      %p303 = scmp.ne.s32.totalorder %s294, %s295
      %p304 = scmp.eq.s32.totalorder %s27, 0
      %p305 = por %p303, %p304
      %p306 = scmp.ne.s32.totalorder %s294, %s295
      %p307 = scmp.eq.s32.totalorder %s28, 1
      %p308 = por %p306, %p307
      %p310 = scmp.ne.s32.totalorder %s295, %s309
      %p311 = scmp.eq.s32.totalorder %s28, 0
      %p312 = por %p310, %p311
      %s313 = ssub.s32 %s22, %s29
      %p314 = scmp.eq.s32.totalorder %s313, 0
      %s316 = sadd.s32 %s315, 1
      %s317 = scalar_select %p314, %s315, %s316
      %p320 = pneg %p314
      %p321 = scmp.eq.s32.totalorder %s22, 1
      %p322 = por %p320, %p321
      %p323 = scmp.ne.s32.totalorder %s315, %s318
      %p324 = scmp.eq.s32.totalorder %s22, 0
      %p325 = por %p323, %p324
      %p326 = scmp.ne.s32.totalorder %s315, %s318
      %p327 = scmp.eq.s32.totalorder %s27, 1
      %p328 = por %p326, %p327
      %p329 = scmp.ne.s32.totalorder %s318, %s319
      %p330 = scmp.eq.s32.totalorder %s27, 0
      %p331 = por %p329, %p330
      %p332 = scmp.ne.s32.totalorder %s318, %s319
      %p333 = scmp.eq.s32.totalorder %s28, 1
      %p334 = por %p332, %p333
      %p336 = scmp.ne.s32.totalorder %s319, %s335
      %p337 = scmp.eq.s32.totalorder %s28, 0
      %p338 = por %p336, %p337
      %p339 = scmp.le.s32.totalorder 1, %s22
      %p340 = scmp.lt.s32.totalorder %s22, 3
      %p341 = pnand %p339, %p340
      %p342 = pneg %p341
      // Predicated region
      $region9: #{color_sh_forward.1} parent=5 // pred_check
        _
      $region10: #{color_sh_forward.1} parent=5 // pred_check_branch
        %344 = sbr.rel (%p341) target = $region12
      $region11: #{color_sh_forward.1} parent=5 // pred_region
        %s345 = ssub.s32 %s22, 1
        // Predicated region
        $region13: #{color_sh_forward.1} parent=11 // pred_check
          %p346 = pneg %p95
        $region14: #{color_sh_forward.1} parent=11 // pred_check_branch
          %348 = sbr.rel (%p346) target = $region16
        $region15: #{color_sh_forward.1} parent=11 // pred_region
          _
        $region16: #{color_sh_forward.1} parent=11 // pred_fallthru
          _
        // Predicated region
        $region17: #{color_sh_forward.1} parent=11 // pred_check
          %p349 = pneg %p116
        $region18: #{color_sh_forward.1} parent=11 // pred_check_branch
          %351 = sbr.rel (%p349) target = $region20
        $region19: #{color_sh_forward.1} parent=11 // pred_region
          _
        $region20: #{color_sh_forward.1} parent=11 // pred_fallthru
          _
        // Predicated region
        $region21: #{color_sh_forward.1} parent=11 // pred_check
          %p352 = pneg %p137
        $region22: #{color_sh_forward.1} parent=11 // pred_check_branch
          %354 = sbr.rel (%p352) target = $region24
        $region23: #{color_sh_forward.1} parent=11 // pred_region
          _
        $region24: #{color_sh_forward.1} parent=11 // pred_fallthru
          _
        // Predicated region
        $region25: #{color_sh_forward.1} parent=11 // pred_check
          %p355 = pneg %p158
        $region26: #{color_sh_forward.1} parent=11 // pred_check_branch
          %357 = sbr.rel (%p355) target = $region28
        $region27: #{color_sh_forward.1} parent=11 // pred_region
          _
        $region28: #{color_sh_forward.1} parent=11 // pred_fallthru
          _
        // Predicated region
        $region29: #{color_sh_forward.1} parent=11 // pred_check
          %p358 = pneg %p179
        $region30: #{color_sh_forward.1} parent=11 // pred_check_branch
          %360 = sbr.rel (%p358) target = $region32
        $region31: #{color_sh_forward.1} parent=11 // pred_region
          _
        $region32: #{color_sh_forward.1} parent=11 // pred_fallthru
          _
        // Predicated region
        $region33: #{color_sh_forward.1} parent=11 // pred_check
          %p361 = pneg %p200
        $region34: #{color_sh_forward.1} parent=11 // pred_check_branch
          %363 = sbr.rel (%p361) target = $region36
        $region35: #{color_sh_forward.1} parent=11 // pred_region
          _
        $region36: #{color_sh_forward.1} parent=11 // pred_fallthru
          _
        // Predicated region
        $region37: #{color_sh_forward.1} parent=11 // pred_check
          %p364 = pneg %p221
        $region38: #{color_sh_forward.1} parent=11 // pred_check_branch
          %366 = sbr.rel (%p364) target = $region40
        $region39: #{color_sh_forward.1} parent=11 // pred_region
          _
        $region40: #{color_sh_forward.1} parent=11 // pred_fallthru
          _
        // Predicated region
        $region41: #{color_sh_forward.1} parent=11 // pred_check
          %p367 = pneg %p242
        $region42: #{color_sh_forward.1} parent=11 // pred_check_branch
          %369 = sbr.rel (%p367) target = $region44
        $region43: #{color_sh_forward.1} parent=11 // pred_region
          _
        $region44: #{color_sh_forward.1} parent=11 // pred_fallthru
          _
        // Predicated region
        $region45: #{color_sh_forward.1} parent=11 // pred_check
          %p370 = pneg %p263
        $region46: #{color_sh_forward.1} parent=11 // pred_check_branch
          %372 = sbr.rel (%p370) target = $region48
        $region47: #{color_sh_forward.1} parent=11 // pred_region
          _
        $region48: #{color_sh_forward.1} parent=11 // pred_fallthru
          _
        // Predicated region
        $region49: #{color_sh_forward.1} parent=11 // pred_check
          %p373 = pneg %p284
        $region50: #{color_sh_forward.1} parent=11 // pred_check_branch
          %375 = sbr.rel (%p373) target = $region52
        $region51: #{color_sh_forward.1} parent=11 // pred_region
          _
        $region52: #{color_sh_forward.1} parent=11 // pred_fallthru
          _
        // Predicated region
        $region53: #{color_sh_forward.1} parent=11 // pred_check
          %p376 = pneg %p305
        $region54: #{color_sh_forward.1} parent=11 // pred_check_branch
          %378 = sbr.rel (%p376) target = $region56
        $region55: #{color_sh_forward.1} parent=11 // pred_region
          _
        $region56: #{color_sh_forward.1} parent=11 // pred_fallthru
          _
      $region12: #{color_sh_forward.1} parent=5 // pred_fallthru
        _
      %p379 = scmp.lt.s32.totalorder %s22, 2
      // Predicated region
      $region57: #{color_sh_forward.1} parent=5 // pred_check
        %p380 = pneg %p379
      $region58: #{color_sh_forward.1} parent=5 // pred_check_branch
        %382 = sbr.rel (%p380) target = $region60
      $region59: #{color_sh_forward.1} parent=5 // pred_region
        // Predicated region
        $region61: #{color_sh_forward.1} parent=59 // pred_check
          %p383 = pneg %p42
        $region62: #{color_sh_forward.1} parent=59 // pred_check_branch
          %385 = sbr.rel (%p383) target = $region64
        $region63: #{color_sh_forward.1} parent=59 // pred_region
          %p386 = scmp.lt.s32.totalorder %s22, 1
          %s387 = scalar_select %p386, %s22, 1
          %s388 = smul.addr %s387, 8
          %s389 = scalar_lea.vmem %s0, %s388
        $region64: #{color_sh_forward.1} parent=59 // pred_fallthru
          _
        // Predicated region
        $region65: #{color_sh_forward.1} parent=59 // pred_check
          %p390 = pneg %p68
        $region66: #{color_sh_forward.1} parent=59 // pred_check_branch
          %392 = sbr.rel (%p390) target = $region68
        $region67: #{color_sh_forward.1} parent=59 // pred_region
          %p393 = scmp.lt.s32.totalorder %s22, 1
          %s394 = scalar_select %p393, %s22, 1
          %s395 = smul.addr %s394, 8
          %s396 = scalar_lea.vmem %s1, %s395
        $region68: #{color_sh_forward.1} parent=59 // pred_fallthru
          _
      $region60: #{color_sh_forward.1} parent=5 // pred_fallthru
        _
      %p397 = scmp.le.s32.totalorder 1, %s22
      %p398 = scmp.lt.s32.totalorder %s22, 3
      %p399 = pnand %p397, %p398
      %p400 = pneg %p399
      // Predicated region
      $region69: #{color_sh_forward.1} parent=5 // pred_check
        _
      $region70: #{color_sh_forward.1} parent=5 // pred_check_branch
        %402 = sbr.rel (%p399) target = $region72
      $region71: #{color_sh_forward.1} parent=5 // pred_region
        %s403 = ssub.s32 %s22, 1
        %p404 = scmp.lt.s32.totalorder %s27, 1
        %s405 = scalar_select %p404, %s27, 1
        %s406 = smul.addr %s405, 8
        %s407 = scalar_lea.vmem %s0, %s406
        %p408 = pneg %p48
        %p409 = pneg %p45
        %p410 = scmp.lt.s32.totalorder %s27, 1
        %s411 = scalar_select %p410, %s27, 1
        %s412 = smul.addr %s411, 8
        %s413 = scalar_lea.vmem %s1, %s412
        %p414 = pneg %p74
        %p415 = pneg %p71
        %p416 = pneg %p95
        %p417 = pneg %p92
        %p418 = pneg %p116
        %p419 = pneg %p113
        %p420 = pneg %p137
        %p421 = pneg %p134
        %p422 = pneg %p158
        %p423 = pneg %p155
        %p424 = pneg %p179
        %p425 = pneg %p176
        %p426 = pneg %p200
        %p427 = pneg %p197
        %p428 = pneg %p221
        %p429 = pneg %p218
        %p430 = pneg %p242
        %p431 = pneg %p239
        %p432 = pneg %p263
        %p433 = pneg %p260
        %p434 = pneg %p284
        %p435 = pneg %p281
        %p436 = pneg %p305
        %p437 = pneg %p302
        %p438 = pneg %p331
        %p439 = pneg %p328
        %s440 = sand.u32 %s318, 1
        %s441 = scalar_lea.sflag [#allocation3], %s440
        %s442 = sand.u32 %s318, 1
        %s443 = smul.addr %s442, 4
        %s444 = scalar_lea.vmem [#allocation2], %s443
        %p445 = scmp.lt.s32.totalorder %s27, 1
        %s446 = scalar_select %p445, %s27, 1
        %s447 = smul.addr %s446, 8
        %s448 = scalar_lea.vmem %s0, %s447
        %p449 = scmp.lt.s32.totalorder %s27, 1
        %s450 = scalar_select %p449, %s27, 1
        %s451 = smul.addr %s450, 8
        %s452 = scalar_lea.vmem %s1, %s451
        %v454 = vld [vmem:[%s448] sm:$0xff]
        %v455 = vld [vmem:[%s452] sm:$0xff]
        %v456 = vld [vmem:[%s2] sm:$0xff]
        %v457 = vld [vmem:[%s2 + $0x8] sm:$0xff]
        %v458 = vld [vmem:[%s2 + $0x10] sm:$0xff]
        %460 = vset.pattern.permute.xlu0 0
        %461 = vperm.xlu0 %460, %v456
        %v462 = vpop.permute.xlu0 %461
        %465 = vset.pattern.permute.xlu0 0
        %466 = vperm.xlu0 %465, %v457
        %v467 = vpop.permute.xlu0 %466
        %470 = vset.pattern.permute.xlu0 0
        %471 = vperm.xlu0 %470, %v458
        %v472 = vpop.permute.xlu0 %471
        %v474 = vmul.f32 %v454, %v462
        %v475 = vmul.f32 %v454, %v467
        %v476 = vmul.f32 %v454, %v472
        %v477 = vand.u32 2147483647, %v474
        %vm478 = vcmp.le.f32.partialorder %v477, 0.7853982
        %vm479 = vcmp.lt.s32.totalorder %v474, 0
        %v480 = vand.u32 %v474, 2139095040
        %v481 = vshrl.u32 %v480, 23
        %v482 = vsub.s32 %v481, 127
        %v483 = vand.u32 2147483647, %v474
        %v484 = vand.u32 %v483, 8388607
        %v485 = vor.u32 %v484, 8388608
        %v486 = vsub.s32 0, %v485
        %v487 = vadd.s32 %v482, 1
        %vm488 = vcmp.gt.s32.totalorder %v487, 0
        %v489 = vsel %vm488, %v487, 0
        %v490 = vshrl.u32 %v489, 5
        %v491 = vand.u32 %v489, 31
        %v492 = vsub.s32 32, %v491
        %v493 = vshrl.u32 683565275, %v492
        %v494 = vshll.u32 683565275, %v491
        %v495 = vshrl.u32 2475754826, %v492
        %v496 = vor.u32 %v494, %v495
        %v497 = vshll.u32 2475754826, %v491
        %v498 = vshrl.u32 2131351028, %v492
        %v499 = vor.u32 %v497, %v498
        %v500 = vshll.u32 2131351028, %v491
        %v501 = vshrl.u32 2102212464, %v492
        %v502 = vor.u32 %v500, %v501
        %v503 = vshll.u32 2102212464, %v491
        %v504 = vshrl.u32 920167782, %v492
        %v505 = vor.u32 %v503, %v504
        %v506 = vshll.u32 920167782, %v491
        %v507 = vshrl.u32 1326507024, %v492
        %v508 = vor.u32 %v506, %v507
        %vm509 = vcmp.lt.s32.totalorder %v490, 1
        %vm510 = vcmp.lt.s32.totalorder %v490, 2
        %vm511 = vcmp.lt.s32.totalorder %v490, 3
        %vm512 = vcmp.lt.s32.totalorder %v490, 4
        %v513 = vsel %vm509, %v493, %v496
        %v514 = vsel %vm512, %v502, 2102212464
        %v515 = vsel %vm511, %v499, %v514
        %v516 = vsel %vm510, %v513, %v515
        %v517 = vsel %vm509, %v496, %v499
        %v518 = vsel %vm512, %v505, 920167782
        %v519 = vsel %vm511, %v502, %v518
        %v520 = vsel %vm510, %v517, %v519
        %v521 = vsel %vm509, %v499, %v502
        %v522 = vsel %vm512, %v508, 1326507024
        %v523 = vsel %vm511, %v505, %v522
        %v524 = vsel %vm510, %v521, %v523
        %v525 = vshll.u32 %v485, 8
        %v526 = vmul.u32.u64.compose %v525, %v524
        %v527 = vextract.low.u32 %v526
        %v528 = vextract.high.u32 %v526
        %v529 = vmul.u32.u64.compose %v525, %v520
        %v530 = vextract.low.u32 %v529
        %v531 = vextract.high.u32 %v529
        %v532 = vmul.u32 %v525, %v516
        %v533 = vadd.s32 %v528, %v530
        %vm534 = vc.u32 %v528, %v530
        %v535 = vadd.s32 %v531, 1
        %v536 = vsel %vm534, %v535, %v531
        %v537 = vadd.s32 %v532, %v536
        %v538 = vadd.s32 %v537, 536870912
        %v539 = vshrl.u32 %v538, 30
        %v540 = vshll.u32 %v539, 30
        %v541 = vsub.s32 %v537, %v540
        %vm542 = vcmp.lt.s32.totalorder %v541, 0
        %v543 = vsub.s32 0, %v541
        %v544 = vsel %vm542, %v543, %v541
        %v545 = vclz %v544
        %v546 = vsub.s32 %v545, 2
        %vm547 = vcmp.gt.s32.totalorder 0, %v546
        %v548 = vsel %vm547, 0, %v546
        %v549 = vsub.s32 32, %v548
        %v550 = vshll.u32 %v541, %v548
        %v551 = vshrl.u32 %v533, %v549
        %v552 = vor.u32 %v550, %v551
        %v553 = vsub.s32 4294967266, %v548
        %v554 = vadd.s32 %v553, 127
        %v555 = vshll.u32 %v554, 23
        %v556 = vor.u32 4788187, %v555
        %v557 = vand.u32 2147483647, %v556
        %v559 = vcvt.s32.f32 %v552
        %v560 = vmul.f32 %v559, %v557
        %v561 = vxor.u32 %v560, 2147483648
        %v562 = vsel %vm479, %v561, %v560
        %v563 = vsub.s32 4, %v539
        %v564 = vsel %vm479, %v563, %v539
        %v565 = vsel %vm478, %v474, %v562
        %v566 = vsel %vm478, 0, %v564
        %v567 = vcosq.f32.pop %v565
        %v568 = vsinq.f32.pop %v565
        %vm569 = vweird.f32 %v474
        %v570 = vadd.s32 %v566, 3
        %v571 = vand.u32 %v570, 3
        %vm572 = vcmp.lt.s32.totalorder %v571, 2
        %vm573 = vcmp.eq.s32.totalorder %v571, 0
        %v574 = vxor.u32 %v568, 2147483648
        %v575 = vsel %vm573, %v567, %v574
        %vm576 = vcmp.eq.s32.totalorder %v571, 2
        %v577 = vxor.u32 %v567, 2147483648
        %v578 = vsel %vm576, %v577, %v568
        %v579 = vsel %vm572, %v575, %v578
        %v580 = vsel %vm569, nan, %v579
        %v581 = vand.u32 2147483647, %v475
        %vm582 = vcmp.le.f32.partialorder %v581, 0.7853982
        %vm583 = vcmp.lt.s32.totalorder %v475, 0
        %v584 = vand.u32 %v475, 2139095040
        %v585 = vshrl.u32 %v584, 23
        %v586 = vsub.s32 %v585, 127
        %v587 = vand.u32 2147483647, %v475
        %v588 = vand.u32 %v587, 8388607
        %v589 = vor.u32 %v588, 8388608
        %v590 = vsub.s32 0, %v589
        %v591 = vadd.s32 %v586, 1
        %vm592 = vcmp.gt.s32.totalorder %v591, 0
        %v593 = vsel %vm592, %v591, 0
        %v594 = vshrl.u32 %v593, 5
        %v595 = vand.u32 %v593, 31
        %v596 = vsub.s32 32, %v595
        %v597 = vshrl.u32 683565275, %v596
        %v598 = vshll.u32 683565275, %v595
        %v599 = vshrl.u32 2475754826, %v596
        %v600 = vor.u32 %v598, %v599
        %v601 = vshll.u32 2475754826, %v595
        %v602 = vshrl.u32 2131351028, %v596
        %v603 = vor.u32 %v601, %v602
        %v604 = vshll.u32 2131351028, %v595
        %v605 = vshrl.u32 2102212464, %v596
        %v606 = vor.u32 %v604, %v605
        %v607 = vshll.u32 2102212464, %v595
        %v608 = vshrl.u32 920167782, %v596
        %v609 = vor.u32 %v607, %v608
        %v610 = vshll.u32 920167782, %v595
        %v611 = vshrl.u32 1326507024, %v596
        %v612 = vor.u32 %v610, %v611
        %vm613 = vcmp.lt.s32.totalorder %v594, 1
        %vm614 = vcmp.lt.s32.totalorder %v594, 2
        %vm615 = vcmp.lt.s32.totalorder %v594, 3
        %vm616 = vcmp.lt.s32.totalorder %v594, 4
        %v617 = vsel %vm613, %v597, %v600
        %v618 = vsel %vm616, %v606, 2102212464
        %v619 = vsel %vm615, %v603, %v618
        %v620 = vsel %vm614, %v617, %v619
        %v621 = vsel %vm613, %v600, %v603
        %v622 = vsel %vm616, %v609, 920167782
        %v623 = vsel %vm615, %v606, %v622
        %v624 = vsel %vm614, %v621, %v623
        %v625 = vsel %vm613, %v603, %v606
        %v626 = vsel %vm616, %v612, 1326507024
        %v627 = vsel %vm615, %v609, %v626
        %v628 = vsel %vm614, %v625, %v627
        %v629 = vshll.u32 %v589, 8
        %v630 = vmul.u32.u64.compose %v629, %v628
        %v631 = vextract.low.u32 %v630
        %v632 = vextract.high.u32 %v630
        %v633 = vmul.u32.u64.compose %v629, %v624
        %v634 = vextract.low.u32 %v633
        %v635 = vextract.high.u32 %v633
        %v636 = vmul.u32 %v629, %v620
        %v637 = vadd.s32 %v632, %v634
        %vm638 = vc.u32 %v632, %v634
        %v639 = vadd.s32 %v635, 1
        %v640 = vsel %vm638, %v639, %v635
        %v641 = vadd.s32 %v636, %v640
        %v642 = vadd.s32 %v641, 536870912
        %v643 = vshrl.u32 %v642, 30
        %v644 = vshll.u32 %v643, 30
        %v645 = vsub.s32 %v641, %v644
        %vm646 = vcmp.lt.s32.totalorder %v645, 0
        %v647 = vsub.s32 0, %v645
        %v648 = vsel %vm646, %v647, %v645
        %v649 = vclz %v648
        %v650 = vsub.s32 %v649, 2
        %vm651 = vcmp.gt.s32.totalorder 0, %v650
        %v652 = vsel %vm651, 0, %v650
        %v653 = vsub.s32 32, %v652
        %v654 = vshll.u32 %v645, %v652
        %v655 = vshrl.u32 %v637, %v653
        %v656 = vor.u32 %v654, %v655
        %v657 = vsub.s32 4294967266, %v652
        %v658 = vadd.s32 %v657, 127
        %v659 = vshll.u32 %v658, 23
        %v660 = vor.u32 4788187, %v659
        %v661 = vand.u32 2147483647, %v660
        %v663 = vcvt.s32.f32 %v656
        %v664 = vmul.f32 %v663, %v661
        %v665 = vxor.u32 %v664, 2147483648
        %v666 = vsel %vm583, %v665, %v664
        %v667 = vsub.s32 4, %v643
        %v668 = vsel %vm583, %v667, %v643
        %v669 = vsel %vm582, %v475, %v666
        %v670 = vsel %vm582, 0, %v668
        %v671 = vcosq.f32.pop %v669
        %v672 = vsinq.f32.pop %v669
        %vm673 = vweird.f32 %v475
        %v674 = vadd.s32 %v670, 3
        %v675 = vand.u32 %v674, 3
        %vm676 = vcmp.lt.s32.totalorder %v675, 2
        %vm677 = vcmp.eq.s32.totalorder %v675, 0
        %v678 = vxor.u32 %v672, 2147483648
        %v679 = vsel %vm677, %v671, %v678
        %vm680 = vcmp.eq.s32.totalorder %v675, 2
        %v681 = vxor.u32 %v671, 2147483648
        %v682 = vsel %vm680, %v681, %v672
        %v683 = vsel %vm676, %v679, %v682
        %v684 = vsel %vm673, nan, %v683
        %v685 = vand.u32 2147483647, %v476
        %vm686 = vcmp.le.f32.partialorder %v685, 0.7853982
        %vm687 = vcmp.lt.s32.totalorder %v476, 0
        %v688 = vand.u32 %v476, 2139095040
        %v689 = vshrl.u32 %v688, 23
        %v690 = vsub.s32 %v689, 127
        %v691 = vand.u32 2147483647, %v476
        %v692 = vand.u32 %v691, 8388607
        %v693 = vor.u32 %v692, 8388608
        %v694 = vsub.s32 0, %v693
        %v695 = vadd.s32 %v690, 1
        %vm696 = vcmp.gt.s32.totalorder %v695, 0
        %v697 = vsel %vm696, %v695, 0
        %v698 = vshrl.u32 %v697, 5
        %v699 = vand.u32 %v697, 31
        %v700 = vsub.s32 32, %v699
        %v701 = vshrl.u32 683565275, %v700
        %v702 = vshll.u32 683565275, %v699
        %v703 = vshrl.u32 2475754826, %v700
        %v704 = vor.u32 %v702, %v703
        %v705 = vshll.u32 2475754826, %v699
        %v706 = vshrl.u32 2131351028, %v700
        %v707 = vor.u32 %v705, %v706
        %v708 = vshll.u32 2131351028, %v699
        %v709 = vshrl.u32 2102212464, %v700
        %v710 = vor.u32 %v708, %v709
        %v711 = vshll.u32 2102212464, %v699
        %v712 = vshrl.u32 920167782, %v700
        %v713 = vor.u32 %v711, %v712
        %v714 = vshll.u32 920167782, %v699
        %v715 = vshrl.u32 1326507024, %v700
        %v716 = vor.u32 %v714, %v715
        %vm717 = vcmp.lt.s32.totalorder %v698, 1
        %vm718 = vcmp.lt.s32.totalorder %v698, 2
        %vm719 = vcmp.lt.s32.totalorder %v698, 3
        %vm720 = vcmp.lt.s32.totalorder %v698, 4
        %v721 = vsel %vm717, %v701, %v704
        %v722 = vsel %vm720, %v710, 2102212464
        %v723 = vsel %vm719, %v707, %v722
        %v724 = vsel %vm718, %v721, %v723
        %v725 = vsel %vm717, %v704, %v707
        %v726 = vsel %vm720, %v713, 920167782
        %v727 = vsel %vm719, %v710, %v726
        %v728 = vsel %vm718, %v725, %v727
        %v729 = vsel %vm717, %v707, %v710
        %v730 = vsel %vm720, %v716, 1326507024
        %v731 = vsel %vm719, %v713, %v730
        %v732 = vsel %vm718, %v729, %v731
        %v733 = vshll.u32 %v693, 8
        %v734 = vmul.u32.u64.compose %v733, %v732
        %v735 = vextract.low.u32 %v734
        %v736 = vextract.high.u32 %v734
        %v737 = vmul.u32.u64.compose %v733, %v728
        %v738 = vextract.low.u32 %v737
        %v739 = vextract.high.u32 %v737
        %v740 = vmul.u32 %v733, %v724
        %v741 = vadd.s32 %v736, %v738
        %vm742 = vc.u32 %v736, %v738
        %v743 = vadd.s32 %v739, 1
        %v744 = vsel %vm742, %v743, %v739
        %v745 = vadd.s32 %v740, %v744
        %v746 = vadd.s32 %v745, 536870912
        %v747 = vshrl.u32 %v746, 30
        %v748 = vshll.u32 %v747, 30
        %v749 = vsub.s32 %v745, %v748
        %vm750 = vcmp.lt.s32.totalorder %v749, 0
        %v751 = vsub.s32 0, %v749
        %v752 = vsel %vm750, %v751, %v749
        %v753 = vclz %v752
        %v754 = vsub.s32 %v753, 2
        %vm755 = vcmp.gt.s32.totalorder 0, %v754
        %v756 = vsel %vm755, 0, %v754
        %v757 = vsub.s32 32, %v756
        %v758 = vshll.u32 %v749, %v756
        %v759 = vshrl.u32 %v741, %v757
        %v760 = vor.u32 %v758, %v759
        %v761 = vsub.s32 4294967266, %v756
        %v762 = vadd.s32 %v761, 127
        %v763 = vshll.u32 %v762, 23
        %v764 = vor.u32 4788187, %v763
        %v765 = vand.u32 2147483647, %v764
        %v767 = vcvt.s32.f32 %v760
        %v768 = vmul.f32 %v767, %v765
        %v769 = vxor.u32 %v768, 2147483648
        %v770 = vsel %vm687, %v769, %v768
        %v771 = vsub.s32 4, %v747
        %v772 = vsel %vm687, %v771, %v747
        %v773 = vsel %vm686, %v476, %v770
        %v774 = vsel %vm686, 0, %v772
        %v775 = vcosq.f32.pop %v773
        %v776 = vsinq.f32.pop %v773
        %vm777 = vweird.f32 %v476
        %v778 = vadd.s32 %v774, 3
        %v779 = vand.u32 %v778, 3
        %vm780 = vcmp.lt.s32.totalorder %v779, 2
        %vm781 = vcmp.eq.s32.totalorder %v779, 0
        %v782 = vxor.u32 %v776, 2147483648
        %v783 = vsel %vm781, %v775, %v782
        %vm784 = vcmp.eq.s32.totalorder %v779, 2
        %v785 = vxor.u32 %v775, 2147483648
        %v786 = vsel %vm784, %v785, %v776
        %v787 = vsel %vm780, %v783, %v786
        %v788 = vsel %vm777, nan, %v787
        %v789 = vand.u32 2147483647, %v474
        %vm790 = vcmp.le.f32.partialorder %v789, 0.7853982
        %vm791 = vcmp.lt.s32.totalorder %v474, 0
        %v792 = vand.u32 %v474, 2139095040
        %v793 = vshrl.u32 %v792, 23
        %v794 = vsub.s32 %v793, 127
        %v795 = vand.u32 2147483647, %v474
        %v796 = vand.u32 %v795, 8388607
        %v797 = vor.u32 %v796, 8388608
        %v798 = vsub.s32 0, %v797
        %v799 = vadd.s32 %v794, 1
        %vm800 = vcmp.gt.s32.totalorder %v799, 0
        %v801 = vsel %vm800, %v799, 0
        %v802 = vshrl.u32 %v801, 5
        %v803 = vand.u32 %v801, 31
        %v804 = vsub.s32 32, %v803
        %v805 = vshrl.u32 683565275, %v804
        %v806 = vshll.u32 683565275, %v803
        %v807 = vshrl.u32 2475754826, %v804
        %v808 = vor.u32 %v806, %v807
        %v809 = vshll.u32 2475754826, %v803
        %v810 = vshrl.u32 2131351028, %v804
        %v811 = vor.u32 %v809, %v810
        %v812 = vshll.u32 2131351028, %v803
        %v813 = vshrl.u32 2102212464, %v804
        %v814 = vor.u32 %v812, %v813
        %v815 = vshll.u32 2102212464, %v803
        %v816 = vshrl.u32 920167782, %v804
        %v817 = vor.u32 %v815, %v816
        %v818 = vshll.u32 920167782, %v803
        %v819 = vshrl.u32 1326507024, %v804
        %v820 = vor.u32 %v818, %v819
        %vm821 = vcmp.lt.s32.totalorder %v802, 1
        %vm822 = vcmp.lt.s32.totalorder %v802, 2
        %vm823 = vcmp.lt.s32.totalorder %v802, 3
        %vm824 = vcmp.lt.s32.totalorder %v802, 4
        %v825 = vsel %vm821, %v805, %v808
        %v826 = vsel %vm824, %v814, 2102212464
        %v827 = vsel %vm823, %v811, %v826
        %v828 = vsel %vm822, %v825, %v827
        %v829 = vsel %vm821, %v808, %v811
        %v830 = vsel %vm824, %v817, 920167782
        %v831 = vsel %vm823, %v814, %v830
        %v832 = vsel %vm822, %v829, %v831
        %v833 = vsel %vm821, %v811, %v814
        %v834 = vsel %vm824, %v820, 1326507024
        %v835 = vsel %vm823, %v817, %v834
        %v836 = vsel %vm822, %v833, %v835
        %v837 = vshll.u32 %v797, 8
        %v838 = vmul.u32.u64.compose %v837, %v836
        %v839 = vextract.low.u32 %v838
        %v840 = vextract.high.u32 %v838
        %v841 = vmul.u32.u64.compose %v837, %v832
        %v842 = vextract.low.u32 %v841
        %v843 = vextract.high.u32 %v841
        %v844 = vmul.u32 %v837, %v828
        %v845 = vadd.s32 %v840, %v842
        %vm846 = vc.u32 %v840, %v842
        %v847 = vadd.s32 %v843, 1
        %v848 = vsel %vm846, %v847, %v843
        %v849 = vadd.s32 %v844, %v848
        %v850 = vadd.s32 %v849, 536870912
        %v851 = vshrl.u32 %v850, 30
        %v852 = vshll.u32 %v851, 30
        %v853 = vsub.s32 %v849, %v852
        %vm854 = vcmp.lt.s32.totalorder %v853, 0
        %v855 = vsub.s32 0, %v853
        %v856 = vsel %vm854, %v855, %v853
        %v857 = vclz %v856
        %v858 = vsub.s32 %v857, 2
        %vm859 = vcmp.gt.s32.totalorder 0, %v858
        %v860 = vsel %vm859, 0, %v858
        %v861 = vsub.s32 32, %v860
        %v862 = vshll.u32 %v853, %v860
        %v863 = vshrl.u32 %v845, %v861
        %v864 = vor.u32 %v862, %v863
        %v865 = vsub.s32 4294967266, %v860
        %v866 = vadd.s32 %v865, 127
        %v867 = vshll.u32 %v866, 23
        %v868 = vor.u32 4788187, %v867
        %v869 = vand.u32 2147483647, %v868
        %v871 = vcvt.s32.f32 %v864
        %v872 = vmul.f32 %v871, %v869
        %v873 = vxor.u32 %v872, 2147483648
        %v874 = vsel %vm791, %v873, %v872
        %v875 = vsub.s32 4, %v851
        %v876 = vsel %vm791, %v875, %v851
        %v877 = vsel %vm790, %v474, %v874
        %v878 = vsel %vm790, 0, %v876
        %v879 = vcosq.f32.pop %v877
        %v880 = vsinq.f32.pop %v877
        %vm881 = vweird.f32 %v474
        %v882 = vand.u32 %v878, 3
        %vm883 = vcmp.lt.s32.totalorder %v882, 2
        %vm884 = vcmp.eq.s32.totalorder %v882, 0
        %v885 = vxor.u32 %v880, 2147483648
        %v886 = vsel %vm884, %v879, %v885
        %vm887 = vcmp.eq.s32.totalorder %v882, 2
        %v888 = vxor.u32 %v879, 2147483648
        %v889 = vsel %vm887, %v888, %v880
        %v890 = vsel %vm883, %v886, %v889
        %v891 = vsel %vm881, nan, %v890
        %v892 = vand.u32 2147483647, %v475
        %vm893 = vcmp.le.f32.partialorder %v892, 0.7853982
        %vm894 = vcmp.lt.s32.totalorder %v475, 0
        %v895 = vand.u32 %v475, 2139095040
        %v896 = vshrl.u32 %v895, 23
        %v897 = vsub.s32 %v896, 127
        %v898 = vand.u32 2147483647, %v475
        %v899 = vand.u32 %v898, 8388607
        %v900 = vor.u32 %v899, 8388608
        %v901 = vsub.s32 0, %v900
        %v902 = vadd.s32 %v897, 1
        %vm903 = vcmp.gt.s32.totalorder %v902, 0
        %v904 = vsel %vm903, %v902, 0
        %v905 = vshrl.u32 %v904, 5
        %v906 = vand.u32 %v904, 31
        %v907 = vsub.s32 32, %v906
        %v908 = vshrl.u32 683565275, %v907
        %v909 = vshll.u32 683565275, %v906
        %v910 = vshrl.u32 2475754826, %v907
        %v911 = vor.u32 %v909, %v910
        %v912 = vshll.u32 2475754826, %v906
        %v913 = vshrl.u32 2131351028, %v907
        %v914 = vor.u32 %v912, %v913
        %v915 = vshll.u32 2131351028, %v906
        %v916 = vshrl.u32 2102212464, %v907
        %v917 = vor.u32 %v915, %v916
        %v918 = vshll.u32 2102212464, %v906
        %v919 = vshrl.u32 920167782, %v907
        %v920 = vor.u32 %v918, %v919
        %v921 = vshll.u32 920167782, %v906
        %v922 = vshrl.u32 1326507024, %v907
        %v923 = vor.u32 %v921, %v922
        %vm924 = vcmp.lt.s32.totalorder %v905, 1
        %vm925 = vcmp.lt.s32.totalorder %v905, 2
        %vm926 = vcmp.lt.s32.totalorder %v905, 3
        %vm927 = vcmp.lt.s32.totalorder %v905, 4
        %v928 = vsel %vm924, %v908, %v911
        %v929 = vsel %vm927, %v917, 2102212464
        %v930 = vsel %vm926, %v914, %v929
        %v931 = vsel %vm925, %v928, %v930
        %v932 = vsel %vm924, %v911, %v914
        %v933 = vsel %vm927, %v920, 920167782
        %v934 = vsel %vm926, %v917, %v933
        %v935 = vsel %vm925, %v932, %v934
        %v936 = vsel %vm924, %v914, %v917
        %v937 = vsel %vm927, %v923, 1326507024
        %v938 = vsel %vm926, %v920, %v937
        %v939 = vsel %vm925, %v936, %v938
        %v940 = vshll.u32 %v900, 8
        %v941 = vmul.u32.u64.compose %v940, %v939
        %v942 = vextract.low.u32 %v941
        %v943 = vextract.high.u32 %v941
        %v944 = vmul.u32.u64.compose %v940, %v935
        %v945 = vextract.low.u32 %v944
        %v946 = vextract.high.u32 %v944
        %v947 = vmul.u32 %v940, %v931
        %v948 = vadd.s32 %v943, %v945
        %vm949 = vc.u32 %v943, %v945
        %v950 = vadd.s32 %v946, 1
        %v951 = vsel %vm949, %v950, %v946
        %v952 = vadd.s32 %v947, %v951
        %v953 = vadd.s32 %v952, 536870912
        %v954 = vshrl.u32 %v953, 30
        %v955 = vshll.u32 %v954, 30
        %v956 = vsub.s32 %v952, %v955
        %vm957 = vcmp.lt.s32.totalorder %v956, 0
        %v958 = vsub.s32 0, %v956
        %v959 = vsel %vm957, %v958, %v956
        %v960 = vclz %v959
        %v961 = vsub.s32 %v960, 2
        %vm962 = vcmp.gt.s32.totalorder 0, %v961
        %v963 = vsel %vm962, 0, %v961
        %v964 = vsub.s32 32, %v963
        %v965 = vshll.u32 %v956, %v963
        %v966 = vshrl.u32 %v948, %v964
        %v967 = vor.u32 %v965, %v966
        %v968 = vsub.s32 4294967266, %v963
        %v969 = vadd.s32 %v968, 127
        %v970 = vshll.u32 %v969, 23
        %v971 = vor.u32 4788187, %v970
        %v972 = vand.u32 2147483647, %v971
        %v974 = vcvt.s32.f32 %v967
        %v975 = vmul.f32 %v974, %v972
        %v976 = vxor.u32 %v975, 2147483648
        %v977 = vsel %vm894, %v976, %v975
        %v978 = vsub.s32 4, %v954
        %v979 = vsel %vm894, %v978, %v954
        %v980 = vsel %vm893, %v475, %v977
        %v981 = vsel %vm893, 0, %v979
        %v982 = vcosq.f32.pop %v980
        %v983 = vsinq.f32.pop %v980
        %vm984 = vweird.f32 %v475
        %v985 = vand.u32 %v981, 3
        %vm986 = vcmp.lt.s32.totalorder %v985, 2
        %vm987 = vcmp.eq.s32.totalorder %v985, 0
        %v988 = vxor.u32 %v983, 2147483648
        %v989 = vsel %vm987, %v982, %v988
        %vm990 = vcmp.eq.s32.totalorder %v985, 2
        %v991 = vxor.u32 %v982, 2147483648
        %v992 = vsel %vm990, %v991, %v983
        %v993 = vsel %vm986, %v989, %v992
        %v994 = vsel %vm984, nan, %v993
        %v995 = vand.u32 2147483647, %v476
        %vm996 = vcmp.le.f32.partialorder %v995, 0.7853982
        %vm997 = vcmp.lt.s32.totalorder %v476, 0
        %v998 = vand.u32 %v476, 2139095040
        %v999 = vshrl.u32 %v998, 23
        %v1000 = vsub.s32 %v999, 127
        %v1001 = vand.u32 2147483647, %v476
        %v1002 = vand.u32 %v1001, 8388607
        %v1003 = vor.u32 %v1002, 8388608
        %v1004 = vsub.s32 0, %v1003
        %v1005 = vadd.s32 %v1000, 1
        %vm1006 = vcmp.gt.s32.totalorder %v1005, 0
        %v1007 = vsel %vm1006, %v1005, 0
        %v1008 = vshrl.u32 %v1007, 5
        %v1009 = vand.u32 %v1007, 31
        %v1010 = vsub.s32 32, %v1009
        %v1011 = vshrl.u32 683565275, %v1010
        %v1012 = vshll.u32 683565275, %v1009
        %v1013 = vshrl.u32 2475754826, %v1010
        %v1014 = vor.u32 %v1012, %v1013
        %v1015 = vshll.u32 2475754826, %v1009
        %v1016 = vshrl.u32 2131351028, %v1010
        %v1017 = vor.u32 %v1015, %v1016
        %v1018 = vshll.u32 2131351028, %v1009
        %v1019 = vshrl.u32 2102212464, %v1010
        %v1020 = vor.u32 %v1018, %v1019
        %v1021 = vshll.u32 2102212464, %v1009
        %v1022 = vshrl.u32 920167782, %v1010
        %v1023 = vor.u32 %v1021, %v1022
        %v1024 = vshll.u32 920167782, %v1009
        %v1025 = vshrl.u32 1326507024, %v1010
        %v1026 = vor.u32 %v1024, %v1025
        %vm1027 = vcmp.lt.s32.totalorder %v1008, 1
        %vm1028 = vcmp.lt.s32.totalorder %v1008, 2
        %vm1029 = vcmp.lt.s32.totalorder %v1008, 3
        %vm1030 = vcmp.lt.s32.totalorder %v1008, 4
        %v1031 = vsel %vm1027, %v1011, %v1014
        %v1032 = vsel %vm1030, %v1020, 2102212464
        %v1033 = vsel %vm1029, %v1017, %v1032
        %v1034 = vsel %vm1028, %v1031, %v1033
        %v1035 = vsel %vm1027, %v1014, %v1017
        %v1036 = vsel %vm1030, %v1023, 920167782
        %v1037 = vsel %vm1029, %v1020, %v1036
        %v1038 = vsel %vm1028, %v1035, %v1037
        %v1039 = vsel %vm1027, %v1017, %v1020
        %v1040 = vsel %vm1030, %v1026, 1326507024
        %v1041 = vsel %vm1029, %v1023, %v1040
        %v1042 = vsel %vm1028, %v1039, %v1041
        %v1043 = vshll.u32 %v1003, 8
        %v1044 = vmul.u32.u64.compose %v1043, %v1042
        %v1045 = vextract.low.u32 %v1044
        %v1046 = vextract.high.u32 %v1044
        %v1047 = vmul.u32.u64.compose %v1043, %v1038
        %v1048 = vextract.low.u32 %v1047
        %v1049 = vextract.high.u32 %v1047
        %v1050 = vmul.u32 %v1043, %v1034
        %v1051 = vadd.s32 %v1046, %v1048
        %vm1052 = vc.u32 %v1046, %v1048
        %v1053 = vadd.s32 %v1049, 1
        %v1054 = vsel %vm1052, %v1053, %v1049
        %v1055 = vadd.s32 %v1050, %v1054
        %v1056 = vadd.s32 %v1055, 536870912
        %v1057 = vshrl.u32 %v1056, 30
        %v1058 = vshll.u32 %v1057, 30
        %v1059 = vsub.s32 %v1055, %v1058
        %vm1060 = vcmp.lt.s32.totalorder %v1059, 0
        %v1061 = vsub.s32 0, %v1059
        %v1062 = vsel %vm1060, %v1061, %v1059
        %v1063 = vclz %v1062
        %v1064 = vsub.s32 %v1063, 2
        %vm1065 = vcmp.gt.s32.totalorder 0, %v1064
        %v1066 = vsel %vm1065, 0, %v1064
        %v1067 = vsub.s32 32, %v1066
        %v1068 = vshll.u32 %v1059, %v1066
        %v1069 = vshrl.u32 %v1051, %v1067
        %v1070 = vor.u32 %v1068, %v1069
        %v1071 = vsub.s32 4294967266, %v1066
        %v1072 = vadd.s32 %v1071, 127
        %v1073 = vshll.u32 %v1072, 23
        %v1074 = vor.u32 4788187, %v1073
        %v1075 = vand.u32 2147483647, %v1074
        %v1077 = vcvt.s32.f32 %v1070
        %v1078 = vmul.f32 %v1077, %v1075
        %v1079 = vxor.u32 %v1078, 2147483648
        %v1080 = vsel %vm997, %v1079, %v1078
        %v1081 = vsub.s32 4, %v1057
        %v1082 = vsel %vm997, %v1081, %v1057
        %v1083 = vsel %vm996, %v476, %v1080
        %v1084 = vsel %vm996, 0, %v1082
        %v1085 = vcosq.f32.pop %v1083
        %v1086 = vsinq.f32.pop %v1083
        %vm1087 = vweird.f32 %v476
        %v1088 = vand.u32 %v1084, 3
        %vm1089 = vcmp.lt.s32.totalorder %v1088, 2
        %vm1090 = vcmp.eq.s32.totalorder %v1088, 0
        %v1091 = vxor.u32 %v1086, 2147483648
        %v1092 = vsel %vm1090, %v1085, %v1091
        %vm1093 = vcmp.eq.s32.totalorder %v1088, 2
        %v1094 = vxor.u32 %v1085, 2147483648
        %v1095 = vsel %vm1093, %v1094, %v1086
        %v1096 = vsel %vm1089, %v1092, %v1095
        %v1097 = vsel %vm1087, nan, %v1096
        %v1098 = vpack.c.bf16 %v684, %v580
        %v1099 = vpack.c.bf16 %v891, %v788
        %v1100 = vpack.c.bf16 %v1097, %v994
        %v1101 = vpack.c.bf16 %v454, %v454
        %v1102 = vld [vmem:[%s3] sm:$0xf]
        %v1103 = vld [vmem:[%s3 + $0x4] sm:$0xf]
        %v1104 = vld [vmem:[%s3 + $0x8] sm:$0xf]
        %v1105 = vld [vmem:[%s3 + $0xc] sm:$0xf]
        %v1110 = vunpack.c.l.b16 %v1102
        %v1111 = vunpack.c.l.b16 %v1103
        %v1112 = vunpack.c.l.b16 %v1104
        %v1113 = vunpack.c.l.b16 %v1105
        %v1114 = vpack.c.b16 %v1111, %v1110
        %v1115 = vpack.c.b16 %v1113, %v1112
        %vm1116 = vcmask 457728
        %v1118 = vsel %vm1116, %v1114, 0
        %v1121 = vsel %vm1116, %v1115, 0
        %vm1123 = vcmask 1043456
        %v1125 = vsel %vm1123, %v1101, 0
        %1127 = vmatprep.subr.bf16.mxu0 0
        %1128 = vmatpush1.bf16.msra.mxu0 0
        %1129 = vmatprep.subr.bf16.mxu0 0
        %1130 = vmatpush1.bf16.msra.mxu0 0
        %1131 = vmatprep.subr.bf16.mxu0 0
        %1132 = vmatpush1.bf16.msra.mxu0 0
        %1133 = vmatprep.subr.bf16.mxu0 0
        %1134 = vmatpush1.bf16.msra.mxu0 0
        %1135 = vmatprep.subr.bf16.mxu0 0
        %1136 = vmatpush1.bf16.msra.mxu0 %v1125
        %1137 = vmatprep.subr.bf16.mxu0 0
        %1138 = vmatpush1.bf16.msra.mxu0 %v1100
        %1139 = vmatprep.subr.bf16.mxu0 0
        %1140 = vmatpush1.bf16.msra.mxu0 %v1099
        %1141 = vmatprep.subr.bf16.mxu0 0
        %1142 = vmatpush1.bf16.msra.mxu0 %v1098
        %1143 = vmatprep.subr.bf16.mxu0 0
        %1144 = vmatpush2.bf16.msra.mxu0 0
        %1145 = vmatprep.subr.bf16.mxu0 0
        %1146 = vmatpush2.bf16.msra.mxu0 0
        %1147 = vmatprep.subr.bf16.mxu0 0
        %1148 = vmatpush2.bf16.msra.mxu0 0
        %1149 = vmatprep.subr.bf16.mxu0 0
        %1150 = vmatpush2.bf16.msra.mxu0 0
        %1151 = vmatprep.subr.bf16.mxu0 0
        %1152 = vmatpush2.bf16.msra.mxu0 0
        %1153 = vmatprep.subr.bf16.mxu0 0
        %1154 = vmatpush2.bf16.msra.mxu0 0
        %1155 = vmatprep.subr.bf16.mxu0 0
        %1156 = vmatpush2.bf16.msra.mxu0 0
        %1157 = vmatprep.subr.bf16.mxu0 0
        %1158 = vmatpush2.bf16.msra.mxu0 0
        %1159 = vmatprep.mubr.bf16.mxu0 0
        %1160 = vmatmul.mubr.bf16.gmra.mxu0 %v1118
        %v1161 = vpop.f32.mrf.mxu0
        %v1162 = vadd.f32 0.0, %v1161
        %v1163 = vpop.f32.mrf.mxu0
        %v1164 = vpop.f32.mrf.mxu0
        %v1165 = vadd.f32 0.0, %v1164
        %v1166 = vpop.f32.mrf.mxu0
        %1167 = vmatprep.mubr.bf16.mxu0 0
        %1168 = vmatmul.mubr.bf16.gmra.mxu0 %v1121
        %v1169 = vpop.f32.mrf.mxu0
        %v1170 = vadd.f32 0.0, %v1169
        %v1171 = vpop.f32.mrf.mxu0
        %v1172 = vpop.f32.mrf.mxu0
        %v1173 = vadd.f32 0.0, %v1172
        %v1174 = vpop.f32.mrf.mxu0
        %1175 = vdwg.mxu0
        %v1176 = vmax.f32 %v1162, 0.0
        %v1177 = vmax.f32 %v1165, 0.0
        %v1178 = vmax.f32 %v1170, 0.0
        %v1179 = vmax.f32 %v1173, 0.0
        %v1180 = vpack.c.bf16 %v1177, %v1176
        %v1181 = vpack.c.bf16 %v1179, %v1178
        %v1182 = vld [vmem:[%s4] sm:$0xf]
        %v1183 = vld [vmem:[%s4 + $0x4] sm:$0xf]
        %v1184 = vld [vmem:[%s4 + $0x8] sm:$0xf]
        %v1185 = vld [vmem:[%s4 + $0xc] sm:$0xf]
        %v1186 = vld [vmem:[%s5] sm:$0xff]
        %v1187 = vld [vmem:[%s5 + $0x8] sm:$0xff]
        %v1188 = vld [vmem:[%s5 + $0x10] sm:$0xff]
        %v1189 = vld [vmem:[%s5 + $0x18] sm:$0xff]
        %1191 = vset.pattern.permute.xlu0 0
        %1192 = vperm.xlu0 %1191, %v1186
        %v1193 = vpop.permute.xlu0 %1192
        %1196 = vset.pattern.permute.xlu0 0
        %1197 = vperm.xlu0 %1196, %v1187
        %v1198 = vpop.permute.xlu0 %1197
        %1201 = vset.pattern.permute.xlu0 0
        %1202 = vperm.xlu0 %1201, %v1188
        %v1203 = vpop.permute.xlu0 %1202
        %1206 = vset.pattern.permute.xlu0 0
        %1207 = vperm.xlu0 %1206, %v1189
        %v1208 = vpop.permute.xlu0 %1207
        %v1214 = vunpack.c.l.b16 %v1182
        %v1215 = vunpack.c.l.b16 %v1183
        %v1216 = vunpack.c.l.b16 %v1184
        %v1217 = vunpack.c.l.b16 %v1185
        %v1218 = vpack.c.b16 %v1215, %v1214
        %v1219 = vpack.c.b16 %v1217, %v1216
        %vm1220 = vcmask 261120
        %v1222 = vsel %vm1220, %v1218, 0
        %v1225 = vsel %vm1220, %v1219, 0
        %1227 = vmatprep.subr.bf16.mxu0 0
        %1228 = vmatpush1.bf16.msra.mxu0 0
        %1229 = vmatprep.subr.bf16.mxu0 0
        %1230 = vmatpush1.bf16.msra.mxu0 0
        %1231 = vmatprep.subr.bf16.mxu0 0
        %1232 = vmatpush1.bf16.msra.mxu0 0
        %1233 = vmatprep.subr.bf16.mxu0 0
        %1234 = vmatpush1.bf16.msra.mxu0 0
        %1235 = vmatprep.subr.bf16.mxu0 0
        %1236 = vmatpush1.bf16.msra.mxu0 0
        %1237 = vmatprep.subr.bf16.mxu0 0
        %1238 = vmatpush1.bf16.msra.mxu0 0
        %1239 = vmatprep.subr.bf16.mxu0 0
        %1240 = vmatpush1.bf16.msra.mxu0 %v1181
        %1241 = vmatprep.subr.bf16.mxu0 0
        %1242 = vmatpush1.bf16.msra.mxu0 %v1180
        %1243 = vmatprep.subr.bf16.mxu0 0
        %1244 = vmatpush2.bf16.msra.mxu0 0
        %1245 = vmatprep.subr.bf16.mxu0 0
        %1246 = vmatpush2.bf16.msra.mxu0 0
        %1247 = vmatprep.subr.bf16.mxu0 0
        %1248 = vmatpush2.bf16.msra.mxu0 0
        %1249 = vmatprep.subr.bf16.mxu0 0
        %1250 = vmatpush2.bf16.msra.mxu0 0
        %1251 = vmatprep.subr.bf16.mxu0 0
        %1252 = vmatpush2.bf16.msra.mxu0 0
        %1253 = vmatprep.subr.bf16.mxu0 0
        %1254 = vmatpush2.bf16.msra.mxu0 0
        %1255 = vmatprep.subr.bf16.mxu0 0
        %1256 = vmatpush2.bf16.msra.mxu0 0
        %1257 = vmatprep.subr.bf16.mxu0 0
        %1258 = vmatpush2.bf16.msra.mxu0 0
        %1259 = vmatprep.mubr.bf16.mxu0 0
        %1260 = vmatmul.mubr.bf16.gmra.mxu0 %v1222
        %v1261 = vpop.f32.mrf.mxu0
        %v1262 = vadd.f32 %v1193, %v1261
        %v1263 = vpop.f32.mrf.mxu0
        %v1264 = vpop.f32.mrf.mxu0
        %v1265 = vadd.f32 %v1198, %v1264
        %v1266 = vpop.f32.mrf.mxu0
        %1267 = vmatprep.mubr.bf16.mxu0 0
        %1268 = vmatmul.mubr.bf16.gmra.mxu0 %v1225
        %v1269 = vpop.f32.mrf.mxu0
        %v1270 = vadd.f32 %v1203, %v1269
        %v1271 = vpop.f32.mrf.mxu0
        %v1272 = vpop.f32.mrf.mxu0
        %v1273 = vadd.f32 %v1208, %v1272
        %v1274 = vpop.f32.mrf.mxu0
        %1275 = vdwg.mxu0
        %v1276 = vmax.f32 %v1262, 0.0
        %v1277 = vmax.f32 %v1265, 0.0
        %v1278 = vmax.f32 %v1270, 0.0
        %v1279 = vmax.f32 %v1273, 0.0
        %v1280 = vpack.c.bf16 %v1277, %v1276
        %v1281 = vpack.c.bf16 %v1279, %v1278
        %v1282 = vld [vmem:[%s6] sm:$0xf]
        %v1283 = vld [vmem:[%s6 + $0x4] sm:$0xf]
        %v1284 = vld [vmem:[%s6 + $0x8] sm:$0xf]
        %v1285 = vld [vmem:[%s6 + $0xc] sm:$0xf]
        %v1286 = vld [vmem:[%s6 + $0x10] sm:$0xf]
        %v1287 = vld [vmem:[%s6 + $0x14] sm:$0xf]
        %v1288 = vld [vmem:[%s7] sm:$0xff]
        %v1289 = vld [vmem:[%s7 + $0x8] sm:$0xff]
        %v1290 = vld [vmem:[%s7 + $0x10] sm:$0xff]
        %v1291 = vld [vmem:[%s7 + $0x18] sm:$0xff]
        %v1292 = vld [vmem:[%s7 + $0x20] sm:$0xff]
        %v1293 = vld [vmem:[%s7 + $0x28] sm:$0xff]
        %1295 = vset.pattern.permute.xlu0 0
        %1296 = vperm.xlu0 %1295, %v1288
        %v1297 = vpop.permute.xlu0 %1296
        %1300 = vset.pattern.permute.xlu0 0
        %1301 = vperm.xlu0 %1300, %v1289
        %v1302 = vpop.permute.xlu0 %1301
        %1305 = vset.pattern.permute.xlu0 0
        %1306 = vperm.xlu0 %1305, %v1290
        %v1307 = vpop.permute.xlu0 %1306
        %1310 = vset.pattern.permute.xlu0 0
        %1311 = vperm.xlu0 %1310, %v1291
        %v1312 = vpop.permute.xlu0 %1311
        %1315 = vset.pattern.permute.xlu0 0
        %1316 = vperm.xlu0 %1315, %v1292
        %v1317 = vpop.permute.xlu0 %1316
        %1320 = vset.pattern.permute.xlu0 0
        %1321 = vperm.xlu0 %1320, %v1293
        %v1322 = vpop.permute.xlu0 %1321
        %v1330 = vunpack.c.l.b16 %v1282
        %v1331 = vunpack.c.l.b16 %v1283
        %v1332 = vunpack.c.l.b16 %v1284
        %v1333 = vunpack.c.l.b16 %v1285
        %v1334 = vunpack.c.l.b16 %v1286
        %v1335 = vunpack.c.l.b16 %v1287
        %v1336 = vpack.c.b16 %v1331, %v1330
        %v1337 = vpack.c.b16 %v1333, %v1332
        %v1338 = vpack.c.b16 %v1335, %v1334
        %v1340 = vsel %vm1220, %v1336, 0
        %v1343 = vsel %vm1220, %v1337, 0
        %v1346 = vsel %vm1220, %v1338, 0
        %1348 = vmatprep.subr.bf16.mxu0 0
        %1349 = vmatpush1.bf16.msra.mxu0 0
        %1350 = vmatprep.subr.bf16.mxu0 0
        %1351 = vmatpush1.bf16.msra.mxu0 0
        %1352 = vmatprep.subr.bf16.mxu0 0
        %1353 = vmatpush1.bf16.msra.mxu0 0
        %1354 = vmatprep.subr.bf16.mxu0 0
        %1355 = vmatpush1.bf16.msra.mxu0 0
        %1356 = vmatprep.subr.bf16.mxu0 0
        %1357 = vmatpush1.bf16.msra.mxu0 0
        %1358 = vmatprep.subr.bf16.mxu0 0
        %1359 = vmatpush1.bf16.msra.mxu0 0
        %1360 = vmatprep.subr.bf16.mxu0 0
        %1361 = vmatpush1.bf16.msra.mxu0 %v1281
        %1362 = vmatprep.subr.bf16.mxu0 0
        %1363 = vmatpush1.bf16.msra.mxu0 %v1280
        %1364 = vmatprep.subr.bf16.mxu0 0
        %1365 = vmatpush2.bf16.msra.mxu0 0
        %1366 = vmatprep.subr.bf16.mxu0 0
        %1367 = vmatpush2.bf16.msra.mxu0 0
        %1368 = vmatprep.subr.bf16.mxu0 0
        %1369 = vmatpush2.bf16.msra.mxu0 0
        %1370 = vmatprep.subr.bf16.mxu0 0
        %1371 = vmatpush2.bf16.msra.mxu0 0
        %1372 = vmatprep.subr.bf16.mxu0 0
        %1373 = vmatpush2.bf16.msra.mxu0 0
        %1374 = vmatprep.subr.bf16.mxu0 0
        %1375 = vmatpush2.bf16.msra.mxu0 0
        %1376 = vmatprep.subr.bf16.mxu0 0
        %1377 = vmatpush2.bf16.msra.mxu0 0
        %1378 = vmatprep.subr.bf16.mxu0 0
        %1379 = vmatpush2.bf16.msra.mxu0 0
        %1380 = vmatprep.mubr.bf16.mxu0 0
        %1381 = vmatmul.mubr.bf16.gmra.mxu0 %v1340
        %v1382 = vpop.f32.mrf.mxu0
        %v1383 = vadd.f32 %v1297, %v1382
        %v1384 = vpop.f32.mrf.mxu0
        %v1385 = vpop.f32.mrf.mxu0
        %v1386 = vadd.f32 %v1302, %v1385
        %v1387 = vpop.f32.mrf.mxu0
        %1388 = vmatprep.mubr.bf16.mxu0 0
        %1389 = vmatmul.mubr.bf16.gmra.mxu0 %v1343
        %v1390 = vpop.f32.mrf.mxu0
        %v1391 = vadd.f32 %v1307, %v1390
        %v1392 = vpop.f32.mrf.mxu0
        %v1393 = vpop.f32.mrf.mxu0
        %v1394 = vadd.f32 %v1312, %v1393
        %v1395 = vpop.f32.mrf.mxu0
        %1396 = vmatprep.mubr.bf16.mxu0 0
        %1397 = vmatmul.mubr.bf16.gmra.mxu0 %v1346
        %v1398 = vpop.f32.mrf.mxu0
        %v1399 = vadd.f32 %v1317, %v1398
        %v1400 = vpop.f32.mrf.mxu0
        %v1401 = vpop.f32.mrf.mxu0
        %v1402 = vadd.f32 %v1322, %v1401
        %v1403 = vpop.f32.mrf.mxu0
        %1404 = vdwg.mxu0
        %v1405 = vld [vmem:[%s8] sm:$0xff]
        %v1406 = vld [vmem:[%s8 + $0x8] sm:$0xff]
        %v1407 = vld [vmem:[%s8 + $0x10] sm:$0xff]
        %vm1408 = vcmask 64512
        %v1410 = vsel %vm1408, %v1405, 0
        %v1413 = vsel %vm1408, %v1406, 0
        %v1416 = vsel %vm1408, %v1407, 0
        %1418 = vmatprep.subr.mxu0 0.0
        %1419 = vmatpush1.msra.mxu0 0.0
        %1420 = vmatprep.subr.mxu0 0.0
        %1421 = vmatpush1.msra.mxu0 0.0
        %1422 = vmatprep.subr.mxu0 0.0
        %1423 = vmatpush1.msra.mxu0 0.0
        %1424 = vmatprep.subr.mxu0 0.0
        %1425 = vmatpush1.msra.mxu0 0.0
        %1426 = vmatprep.subr.mxu0 0.0
        %1427 = vmatpush1.msra.mxu0 0.0
        %1428 = vmatprep.subr.mxu0 0.0
        %1429 = vmatpush1.msra.mxu0 0.0
        %1430 = vmatprep.subr.mxu0 0.0
        %1431 = vmatpush1.msra.mxu0 0.0
        %1432 = vmatprep.subr.mxu0 0.0
        %1433 = vmatpush1.msra.mxu0 0.0
        %1434 = vmatprep.subr.mxu0 0.0
        %1435 = vmatpush1.msra.mxu0 0.0
        %1436 = vmatprep.subr.mxu0 0.0
        %1437 = vmatpush1.msra.mxu0 0.0
        %1438 = vmatprep.subr.mxu0 0.0
        %1439 = vmatpush1.msra.mxu0 0.0
        %1440 = vmatprep.subr.mxu0 0.0
        %1441 = vmatpush1.msra.mxu0 0.0
        %1442 = vmatprep.subr.mxu0 0.0
        %1443 = vmatpush1.msra.mxu0 0.0
        %1444 = vmatprep.subr.mxu0 0.0
        %1445 = vmatpush1.msra.mxu0 0.0
        %1446 = vmatprep.subr.mxu0 0.0
        %1447 = vmatpush1.msra.mxu0 0.0
        %1448 = vmatprep.subr.mxu0 0.0
        %1449 = vmatpush1.msra.mxu0 %v455
        %1450 = vmatprep.subr.mxu0 0.0
        %1451 = vmatpush2.msra.mxu0 0.0
        %1452 = vmatprep.subr.mxu0 0.0
        %1453 = vmatpush2.msra.mxu0 0.0
        %1454 = vmatprep.subr.mxu0 0.0
        %1455 = vmatpush2.msra.mxu0 0.0
        %1456 = vmatprep.subr.mxu0 0.0
        %1457 = vmatpush2.msra.mxu0 0.0
        %1458 = vmatprep.subr.mxu0 0.0
        %1459 = vmatpush2.msra.mxu0 0.0
        %1460 = vmatprep.subr.mxu0 0.0
        %1461 = vmatpush2.msra.mxu0 0.0
        %1462 = vmatprep.subr.mxu0 0.0
        %1463 = vmatpush2.msra.mxu0 0.0
        %1464 = vmatprep.subr.mxu0 0.0
        %1465 = vmatpush2.msra.mxu0 0.0
        %1466 = vmatprep.subr.mxu0 0.0
        %1467 = vmatpush2.msra.mxu0 0.0
        %1468 = vmatprep.subr.mxu0 0.0
        %1469 = vmatpush2.msra.mxu0 0.0
        %1470 = vmatprep.subr.mxu0 0.0
        %1471 = vmatpush2.msra.mxu0 0.0
        %1472 = vmatprep.subr.mxu0 0.0
        %1473 = vmatpush2.msra.mxu0 0.0
        %1474 = vmatprep.subr.mxu0 0.0
        %1475 = vmatpush2.msra.mxu0 0.0
        %1476 = vmatprep.subr.mxu0 0.0
        %1477 = vmatpush2.msra.mxu0 0.0
        %1478 = vmatprep.subr.mxu0 0.0
        %1479 = vmatpush2.msra.mxu0 0.0
        %1480 = vmatprep.subr.mxu0 0.0
        %1481 = vmatpush2.msra.mxu0 0.0
        %1482 = vmatprep.mubr.f32.mxu0 0.0
        %1483 = vmatmul.mubr.f32.gmra.mxu0 %v1410
        %v1484 = vpop.f32.mrf.mxu0
        %v1485 = vadd.f32 0.0, %v1484
        %v1486 = vpop.f32.mrf.mxu0
        %1487 = vmatprep.mubr.f32.mxu0 0.0
        %1488 = vmatmul.mubr.f32.gmra.mxu0 %v1413
        %v1489 = vpop.f32.mrf.mxu0
        %v1490 = vadd.f32 0.0, %v1489
        %v1491 = vpop.f32.mrf.mxu0
        %1492 = vmatprep.mubr.f32.mxu0 0.0
        %1493 = vmatmul.mubr.f32.gmra.mxu0 %v1416
        %v1494 = vpop.f32.mrf.mxu0
        %v1495 = vadd.f32 0.0, %v1494
        %v1496 = vpop.f32.mrf.mxu0
        %1497 = vdwg.mxu0
        %v1498 = vld [vmem:[%s9] sm:$0xff]
        %v1499 = vld [vmem:[%s9 + $0x8] sm:$0xff]
        %v1500 = vld [vmem:[%s9 + $0x10] sm:$0xff]
        %v1502 = vsel %vm1408, %v1498, 0
        %v1505 = vsel %vm1408, %v1499, 0
        %v1508 = vsel %vm1408, %v1500, 0
        %1510 = vmatprep.subr.mxu0 0.0
        %1511 = vmatpush1.msra.mxu0 0.0
        %1512 = vmatprep.subr.mxu0 0.0
        %1513 = vmatpush1.msra.mxu0 0.0
        %1514 = vmatprep.subr.mxu0 0.0
        %1515 = vmatpush1.msra.mxu0 0.0
        %1516 = vmatprep.subr.mxu0 0.0
        %1517 = vmatpush1.msra.mxu0 0.0
        %1518 = vmatprep.subr.mxu0 0.0
        %1519 = vmatpush1.msra.mxu0 0.0
        %1520 = vmatprep.subr.mxu0 0.0
        %1521 = vmatpush1.msra.mxu0 0.0
        %1522 = vmatprep.subr.mxu0 0.0
        %1523 = vmatpush1.msra.mxu0 0.0
        %1524 = vmatprep.subr.mxu0 0.0
        %1525 = vmatpush1.msra.mxu0 0.0
        %1526 = vmatprep.subr.mxu0 0.0
        %1527 = vmatpush1.msra.mxu0 0.0
        %1528 = vmatprep.subr.mxu0 0.0
        %1529 = vmatpush1.msra.mxu0 0.0
        %1530 = vmatprep.subr.mxu0 0.0
        %1531 = vmatpush1.msra.mxu0 0.0
        %1532 = vmatprep.subr.mxu0 0.0
        %1533 = vmatpush1.msra.mxu0 0.0
        %1534 = vmatprep.subr.mxu0 0.0
        %1535 = vmatpush1.msra.mxu0 0.0
        %1536 = vmatprep.subr.mxu0 0.0
        %1537 = vmatpush1.msra.mxu0 0.0
        %1538 = vmatprep.subr.mxu0 0.0
        %1539 = vmatpush1.msra.mxu0 0.0
        %1540 = vmatprep.subr.mxu0 0.0
        %1541 = vmatpush1.msra.mxu0 %v455
        %1542 = vmatprep.subr.mxu0 0.0
        %1543 = vmatpush2.msra.mxu0 0.0
        %1544 = vmatprep.subr.mxu0 0.0
        %1545 = vmatpush2.msra.mxu0 0.0
        %1546 = vmatprep.subr.mxu0 0.0
        %1547 = vmatpush2.msra.mxu0 0.0
        %1548 = vmatprep.subr.mxu0 0.0
        %1549 = vmatpush2.msra.mxu0 0.0
        %1550 = vmatprep.subr.mxu0 0.0
        %1551 = vmatpush2.msra.mxu0 0.0
        %1552 = vmatprep.subr.mxu0 0.0
        %1553 = vmatpush2.msra.mxu0 0.0
        %1554 = vmatprep.subr.mxu0 0.0
        %1555 = vmatpush2.msra.mxu0 0.0
        %1556 = vmatprep.subr.mxu0 0.0
        %1557 = vmatpush2.msra.mxu0 0.0
        %1558 = vmatprep.subr.mxu0 0.0
        %1559 = vmatpush2.msra.mxu0 0.0
        %1560 = vmatprep.subr.mxu0 0.0
        %1561 = vmatpush2.msra.mxu0 0.0
        %1562 = vmatprep.subr.mxu0 0.0
        %1563 = vmatpush2.msra.mxu0 0.0
        %1564 = vmatprep.subr.mxu0 0.0
        %1565 = vmatpush2.msra.mxu0 0.0
        %1566 = vmatprep.subr.mxu0 0.0
        %1567 = vmatpush2.msra.mxu0 0.0
        %1568 = vmatprep.subr.mxu0 0.0
        %1569 = vmatpush2.msra.mxu0 0.0
        %1570 = vmatprep.subr.mxu0 0.0
        %1571 = vmatpush2.msra.mxu0 0.0
        %1572 = vmatprep.subr.mxu0 0.0
        %1573 = vmatpush2.msra.mxu0 0.0
        %1574 = vmatprep.mubr.f32.mxu0 0.0
        %1575 = vmatmul.mubr.f32.gmra.mxu0 %v1502
        %v1576 = vpop.f32.mrf.mxu0
        %v1577 = vadd.f32 0.0, %v1576
        %v1578 = vpop.f32.mrf.mxu0
        %1579 = vmatprep.mubr.f32.mxu0 0.0
        %1580 = vmatmul.mubr.f32.gmra.mxu0 %v1505
        %v1581 = vpop.f32.mrf.mxu0
        %v1582 = vadd.f32 0.0, %v1581
        %v1583 = vpop.f32.mrf.mxu0
        %1584 = vmatprep.mubr.f32.mxu0 0.0
        %1585 = vmatmul.mubr.f32.gmra.mxu0 %v1508
        %v1586 = vpop.f32.mrf.mxu0
        %v1587 = vadd.f32 0.0, %v1586
        %v1588 = vpop.f32.mrf.mxu0
        %1589 = vdwg.mxu0
        %v1590 = vld [vmem:[%s10] sm:$0xff]
        %v1591 = vld [vmem:[%s10 + $0x8] sm:$0xff]
        %v1592 = vld [vmem:[%s10 + $0x10] sm:$0xff]
        %v1594 = vsel %vm1408, %v1590, 0
        %v1597 = vsel %vm1408, %v1591, 0
        %v1600 = vsel %vm1408, %v1592, 0
        %1602 = vmatprep.subr.mxu0 0.0
        %1603 = vmatpush1.msra.mxu0 0.0
        %1604 = vmatprep.subr.mxu0 0.0
        %1605 = vmatpush1.msra.mxu0 0.0
        %1606 = vmatprep.subr.mxu0 0.0
        %1607 = vmatpush1.msra.mxu0 0.0
        %1608 = vmatprep.subr.mxu0 0.0
        %1609 = vmatpush1.msra.mxu0 0.0
        %1610 = vmatprep.subr.mxu0 0.0
        %1611 = vmatpush1.msra.mxu0 0.0
        %1612 = vmatprep.subr.mxu0 0.0
        %1613 = vmatpush1.msra.mxu0 0.0
        %1614 = vmatprep.subr.mxu0 0.0
        %1615 = vmatpush1.msra.mxu0 0.0
        %1616 = vmatprep.subr.mxu0 0.0
        %1617 = vmatpush1.msra.mxu0 0.0
        %1618 = vmatprep.subr.mxu0 0.0
        %1619 = vmatpush1.msra.mxu0 0.0
        %1620 = vmatprep.subr.mxu0 0.0
        %1621 = vmatpush1.msra.mxu0 0.0
        %1622 = vmatprep.subr.mxu0 0.0
        %1623 = vmatpush1.msra.mxu0 0.0
        %1624 = vmatprep.subr.mxu0 0.0
        %1625 = vmatpush1.msra.mxu0 0.0
        %1626 = vmatprep.subr.mxu0 0.0
        %1627 = vmatpush1.msra.mxu0 0.0
        %1628 = vmatprep.subr.mxu0 0.0
        %1629 = vmatpush1.msra.mxu0 0.0
        %1630 = vmatprep.subr.mxu0 0.0
        %1631 = vmatpush1.msra.mxu0 0.0
        %1632 = vmatprep.subr.mxu0 0.0
        %1633 = vmatpush1.msra.mxu0 %v455
        %1634 = vmatprep.subr.mxu0 0.0
        %1635 = vmatpush2.msra.mxu0 0.0
        %1636 = vmatprep.subr.mxu0 0.0
        %1637 = vmatpush2.msra.mxu0 0.0
        %1638 = vmatprep.subr.mxu0 0.0
        %1639 = vmatpush2.msra.mxu0 0.0
        %1640 = vmatprep.subr.mxu0 0.0
        %1641 = vmatpush2.msra.mxu0 0.0
        %1642 = vmatprep.subr.mxu0 0.0
        %1643 = vmatpush2.msra.mxu0 0.0
        %1644 = vmatprep.subr.mxu0 0.0
        %1645 = vmatpush2.msra.mxu0 0.0
        %1646 = vmatprep.subr.mxu0 0.0
        %1647 = vmatpush2.msra.mxu0 0.0
        %1648 = vmatprep.subr.mxu0 0.0
        %1649 = vmatpush2.msra.mxu0 0.0
        %1650 = vmatprep.subr.mxu0 0.0
        %1651 = vmatpush2.msra.mxu0 0.0
        %1652 = vmatprep.subr.mxu0 0.0
        %1653 = vmatpush2.msra.mxu0 0.0
        %1654 = vmatprep.subr.mxu0 0.0
        %1655 = vmatpush2.msra.mxu0 0.0
        %1656 = vmatprep.subr.mxu0 0.0
        %1657 = vmatpush2.msra.mxu0 0.0
        %1658 = vmatprep.subr.mxu0 0.0
        %1659 = vmatpush2.msra.mxu0 0.0
        %1660 = vmatprep.subr.mxu0 0.0
        %1661 = vmatpush2.msra.mxu0 0.0
        %1662 = vmatprep.subr.mxu0 0.0
        %1663 = vmatpush2.msra.mxu0 0.0
        %1664 = vmatprep.subr.mxu0 0.0
        %1665 = vmatpush2.msra.mxu0 0.0
        %1666 = vmatprep.mubr.f32.mxu0 0.0
        %1667 = vmatmul.mubr.f32.gmra.mxu0 %v1594
        %v1668 = vpop.f32.mrf.mxu0
        %v1669 = vadd.f32 0.0, %v1668
        %v1670 = vpop.f32.mrf.mxu0
        %1671 = vmatprep.mubr.f32.mxu0 0.0
        %1672 = vmatmul.mubr.f32.gmra.mxu0 %v1597
        %v1673 = vpop.f32.mrf.mxu0
        %v1674 = vadd.f32 0.0, %v1673
        %v1675 = vpop.f32.mrf.mxu0
        %1676 = vmatprep.mubr.f32.mxu0 0.0
        %1677 = vmatmul.mubr.f32.gmra.mxu0 %v1600
        %v1678 = vpop.f32.mrf.mxu0
        %v1679 = vadd.f32 0.0, %v1678
        %v1680 = vpop.f32.mrf.mxu0
        %1681 = vdwg.mxu0
        %v1682 = vmul.f32 %v1485, %v1577
        %v1683 = vmul.f32 %v1490, %v1582
        %v1684 = vmul.f32 %v1495, %v1587
        %v1685 = vmul.f32 %v1682, %v1669
        %v1686 = vmul.f32 %v1683, %v1674
        %v1687 = vmul.f32 %v1684, %v1679
        %v1688 = vpack.c.bf16 %v1686, %v1685
        %v1689 = vpack.c.bf16 %v1687, %v1687
        %v1690 = vld [vmem:[%s11] sm:$0xf]
        %v1691 = vld [vmem:[%s11 + $0x4] sm:$0xf]
        %v1692 = vld [vmem:[%s11 + $0x8] sm:$0xf]
        %v1693 = vld [vmem:[%s11 + $0xc] sm:$0xf]
        %v1694 = vld [vmem:[%s11 + $0x10] sm:$0xf]
        %v1695 = vld [vmem:[%s11 + $0x14] sm:$0xf]
        %v1702 = vunpack.c.l.b16 %v1690
        %v1703 = vunpack.c.l.b16 %v1691
        %v1704 = vunpack.c.l.b16 %v1692
        %v1705 = vunpack.c.l.b16 %v1693
        %v1706 = vunpack.c.l.b16 %v1694
        %v1707 = vunpack.c.l.b16 %v1695
        %v1708 = vpack.c.b16 %v1703, %v1702
        %v1709 = vpack.c.b16 %v1705, %v1704
        %v1710 = vpack.c.b16 %v1707, %v1706
        %vm1711 = vcmask 195584
        %v1713 = vsel %vm1711, %v1708, 0
        %v1716 = vsel %vm1711, %v1709, 0
        %v1719 = vsel %vm1711, %v1710, 0
        %v1722 = vsel %vm1123, %v1689, 0
        %1724 = vmatprep.subr.bf16.mxu0 0
        %1725 = vmatpush1.bf16.msra.mxu0 0
        %1726 = vmatprep.subr.bf16.mxu0 0
        %1727 = vmatpush1.bf16.msra.mxu0 0
        %1728 = vmatprep.subr.bf16.mxu0 0
        %1729 = vmatpush1.bf16.msra.mxu0 0
        %1730 = vmatprep.subr.bf16.mxu0 0
        %1731 = vmatpush1.bf16.msra.mxu0 0
        %1732 = vmatprep.subr.bf16.mxu0 0
        %1733 = vmatpush1.bf16.msra.mxu0 0
        %1734 = vmatprep.subr.bf16.mxu0 0
        %1735 = vmatpush1.bf16.msra.mxu0 0
        %1736 = vmatprep.subr.bf16.mxu0 0
        %1737 = vmatpush1.bf16.msra.mxu0 %v1722
        %1738 = vmatprep.subr.bf16.mxu0 0
        %1739 = vmatpush1.bf16.msra.mxu0 %v1688
        %1740 = vmatprep.subr.bf16.mxu0 0
        %1741 = vmatpush2.bf16.msra.mxu0 0
        %1742 = vmatprep.subr.bf16.mxu0 0
        %1743 = vmatpush2.bf16.msra.mxu0 0
        %1744 = vmatprep.subr.bf16.mxu0 0
        %1745 = vmatpush2.bf16.msra.mxu0 0
        %1746 = vmatprep.subr.bf16.mxu0 0
        %1747 = vmatpush2.bf16.msra.mxu0 0
        %1748 = vmatprep.subr.bf16.mxu0 0
        %1749 = vmatpush2.bf16.msra.mxu0 0
        %1750 = vmatprep.subr.bf16.mxu0 0
        %1751 = vmatpush2.bf16.msra.mxu0 0
        %1752 = vmatprep.subr.bf16.mxu0 0
        %1753 = vmatpush2.bf16.msra.mxu0 0
        %1754 = vmatprep.subr.bf16.mxu0 0
        %1755 = vmatpush2.bf16.msra.mxu0 0
        %1756 = vmatprep.mubr.bf16.mxu0 0
        %1757 = vmatmul.mubr.bf16.gmra.mxu0 %v1713
        %v1758 = vpop.f32.mrf.mxu0
        %v1759 = vadd.f32 0.0, %v1758
        %v1760 = vpop.f32.mrf.mxu0
        %v1761 = vpop.f32.mrf.mxu0
        %v1762 = vadd.f32 0.0, %v1761
        %v1763 = vpop.f32.mrf.mxu0
        %1764 = vmatprep.mubr.bf16.mxu0 0
        %1765 = vmatmul.mubr.bf16.gmra.mxu0 %v1716
        %v1766 = vpop.f32.mrf.mxu0
        %v1767 = vadd.f32 0.0, %v1766
        %v1768 = vpop.f32.mrf.mxu0
        %v1769 = vpop.f32.mrf.mxu0
        %v1770 = vadd.f32 0.0, %v1769
        %v1771 = vpop.f32.mrf.mxu0
        %1772 = vmatprep.mubr.bf16.mxu0 0
        %1773 = vmatmul.mubr.bf16.gmra.mxu0 %v1719
        %v1774 = vpop.f32.mrf.mxu0
        %v1775 = vadd.f32 0.0, %v1774
        %v1776 = vpop.f32.mrf.mxu0
        %v1777 = vpop.f32.mrf.mxu0
        %v1778 = vadd.f32 0.0, %v1777
        %v1779 = vpop.f32.mrf.mxu0
        %1780 = vdwg.mxu0
        %v1781 = vld [vmem:[%s12] sm:$0xff]
        %v1782 = vmul.f32 %v1383, %v1759
        %v1783 = vmul.f32 %v1386, %v1762
        %v1784 = vmul.f32 %v1391, %v1767
        %v1785 = vmul.f32 %v1394, %v1770
        %v1786 = vmul.f32 %v1399, %v1775
        %v1787 = vmul.f32 %v1402, %v1778
        %vm1788 = vcmask 392192
        %v1790 = vsel %vm1788, %v1781, 0
        %1792 = vmatprep.subr.mxu0 0.0
        %1793 = vmatpush1.msra.mxu0 0.0
        %1794 = vmatprep.subr.mxu0 0.0
        %1795 = vmatpush1.msra.mxu0 0.0
        %1796 = vmatprep.subr.mxu0 0.0
        %1797 = vmatpush1.msra.mxu0 0.0
        %1798 = vmatprep.subr.mxu0 0.0
        %1799 = vmatpush1.msra.mxu0 0.0
        %1800 = vmatprep.subr.mxu0 0.0
        %1801 = vmatpush1.msra.mxu0 0.0
        %1802 = vmatprep.subr.mxu0 0.0
        %1803 = vmatpush1.msra.mxu0 0.0
        %1804 = vmatprep.subr.mxu0 0.0
        %1805 = vmatpush1.msra.mxu0 0.0
        %1806 = vmatprep.subr.mxu0 0.0
        %1807 = vmatpush1.msra.mxu0 0.0
        %1808 = vmatprep.subr.mxu0 0.0
        %1809 = vmatpush1.msra.mxu0 0.0
        %1810 = vmatprep.subr.mxu0 0.0
        %1811 = vmatpush1.msra.mxu0 0.0
        %1812 = vmatprep.subr.mxu0 0.0
        %1813 = vmatpush1.msra.mxu0 %v1787
        %1814 = vmatprep.subr.mxu0 0.0
        %1815 = vmatpush1.msra.mxu0 %v1786
        %1816 = vmatprep.subr.mxu0 0.0
        %1817 = vmatpush1.msra.mxu0 %v1785
        %1818 = vmatprep.subr.mxu0 0.0
        %1819 = vmatpush1.msra.mxu0 %v1784
        %1820 = vmatprep.subr.mxu0 0.0
        %1821 = vmatpush1.msra.mxu0 %v1783
        %1822 = vmatprep.subr.mxu0 0.0
        %1823 = vmatpush1.msra.mxu0 %v1782
        %1824 = vmatprep.subr.mxu0 0.0
        %1825 = vmatpush2.msra.mxu0 0.0
        %1826 = vmatprep.subr.mxu0 0.0
        %1827 = vmatpush2.msra.mxu0 0.0
        %1828 = vmatprep.subr.mxu0 0.0
        %1829 = vmatpush2.msra.mxu0 0.0
        %1830 = vmatprep.subr.mxu0 0.0
        %1831 = vmatpush2.msra.mxu0 0.0
        %1832 = vmatprep.subr.mxu0 0.0
        %1833 = vmatpush2.msra.mxu0 0.0
        %1834 = vmatprep.subr.mxu0 0.0
        %1835 = vmatpush2.msra.mxu0 0.0
        %1836 = vmatprep.subr.mxu0 0.0
        %1837 = vmatpush2.msra.mxu0 0.0
        %1838 = vmatprep.subr.mxu0 0.0
        %1839 = vmatpush2.msra.mxu0 0.0
        %1840 = vmatprep.subr.mxu0 0.0
        %1841 = vmatpush2.msra.mxu0 0.0
        %1842 = vmatprep.subr.mxu0 0.0
        %1843 = vmatpush2.msra.mxu0 0.0
        %1844 = vmatprep.subr.mxu0 0.0
        %1845 = vmatpush2.msra.mxu0 0.0
        %1846 = vmatprep.subr.mxu0 0.0
        %1847 = vmatpush2.msra.mxu0 0.0
        %1848 = vmatprep.subr.mxu0 0.0
        %1849 = vmatpush2.msra.mxu0 0.0
        %1850 = vmatprep.subr.mxu0 0.0
        %1851 = vmatpush2.msra.mxu0 0.0
        %1852 = vmatprep.subr.mxu0 0.0
        %1853 = vmatpush2.msra.mxu0 0.0
        %1854 = vmatprep.subr.mxu0 0.0
        %1855 = vmatpush2.msra.mxu0 0.0
        %1856 = vmatprep.mubr.f32.mxu0 0.0
        %1857 = vmatmul.mubr.f32.gmra.mxu0 %v1790
        %v1858 = vpop.f32.mrf.mxu0
        %v1859 = vadd.f32 0.0, %v1858
        %v1860 = vpop.f32.mrf.mxu0
        %1861 = vdwg.mxu0
        %v1862 = vxor.u32 %v1859, 2147483648
        %v1863 = vmul.f32 %v1862, 1.442695
        %v1864 = vpow.pop %v1863
        %v1865 = vadd.f32 %v1864, 1.0
        %v1866 = vrcp.pop %v1865
        %v1867 = vmul.f32 1.0, %v1866
        %1868 = vst [vmem:[%s444] sm:$0x7] %v1867
        %s1869 = sand.u32 %s318, 1
        %s1870 = scalar_lea.sflag [#allocation3], %s1869
        %s1871 = sand.u32 %s318, 1
        %s1872 = smul.addr %s1871, 4
        %s1873 = scalar_lea.vmem [#allocation2], %s1872
        // Predicated region
        $region73: #{color_sh_forward.1} parent=71 // pred_check
          %p1874 = pneg %p328
        $region74: #{color_sh_forward.1} parent=71 // pred_check_branch
          %1876 = sbr.rel (%p1874) target = $region76
        $region75: #{color_sh_forward.1} parent=71 // pred_region
          %s1878 = ssub.s32 64, 64
          %1879 = vsyncadd %s1870, %s1878
          %s1880 = smul.addr %s27, 64
          %s1881 = scalar_lea.hbm %s13, %s1880
          %s1883 = sshll.u32 %s1873, 4
          %s1884 = int_to_ptr.vmem [resolvable:$true] %s1883
          %1886 = dma.vmem_to_hbm [thread:$0]  %s1884, 64, %s1881, %s1870
        $region76: #{color_sh_forward.1} parent=71 // pred_fallthru
          _
      $region72: #{color_sh_forward.1} parent=5 // pred_fallthru
        _
      %p1887 = scmp.le.s32.totalorder 2, %s22
      // Predicated region
      $region77: #{color_sh_forward.1} parent=5 // pred_check
        %p1888 = pneg %p1887
      $region78: #{color_sh_forward.1} parent=5 // pred_check_branch
        %1890 = sbr.rel (%p1888) target = $region80
      $region79: #{color_sh_forward.1} parent=5 // pred_region
        %s1891 = ssub.s32 %s22, 2
        // Predicated region
        $region81: #{color_sh_forward.1} parent=79 // pred_check
          %p1892 = pneg %p334
        $region82: #{color_sh_forward.1} parent=79 // pred_check_branch
          %1894 = sbr.rel (%p1892) target = $region84
        $region83: #{color_sh_forward.1} parent=79 // pred_region
          %s1895 = sand.u32 %s319, 1
          %s1896 = scalar_lea.sflag [#allocation3], %s1895
          %s1897 = sand.u32 %s319, 1
          %s1898 = smul.addr %s1897, 4
          %s1899 = scalar_lea.vmem [#allocation2], %s1898
          %1900 = dma.done %s1896, 64
        $region84: #{color_sh_forward.1} parent=79 // pred_fallthru
          _
      $region80: #{color_sh_forward.1} parent=5 // pred_fallthru
        _
    $region6: #{color_sh_forward.1} parent=1 // loop_footer
      %s26 = sadd.s32 1, %s22
    $region7: #{color_sh_forward.1} parent=1 // loop_footer_branch
      %21 = sbr.rel target = $region3
    $region8: #{color_sh_forward.1} parent=1 // loop_exit
      _
    %1901 = vsyncpa [#allocation3], 1
    %s1902 = scalar_lea.sflag [#allocation3], 1
    %1903 = vsyncpa %s1902, 1

</llo_original>
